<compile_context>
chip_gen: v5e
topology: v5e:2x2
jax: 0.10.0
libtpu: 0.0.40
codegen_flags: <defaults>
</compile_context>

<pallas_src>
import functools

import jax
import jax.numpy as jnp
from jax.experimental import pallas as pl
from jax.experimental.pallas import tpu as pltpu

HP = 128                   # padded hidden width (lanes)
FP = 128                   # padded input-feature width (lanes)
BIAS0 = 3 * HP             # first bias row (8-sublane aligned)
PROWS = 3 * HP + 3 * 8     # packed parameter slab rows (multiple of 8)


# --------------------------------------------------------------------------- kernel
def graph_encoder_kernel(a_ref, x_ref, p_ref, out_ref, *,
                         graphs_per_block, nodes_per_graph):
    G, N = graphs_per_block, nodes_per_graph
    f32 = jnp.float32
    bf16 = jnp.bfloat16

    def graph_conv_relu(h_bf16, w_row, b_row):
        # GraphConv: Ahat @ (H @ W) + b   (f32 accumulation), then ReLU in f32.
        # Parameters are sliced at point of use to keep vreg live ranges short.
        w = p_ref[w_row:w_row + HP, :]                                   # (HP, HP) bf16
        hw = jnp.dot(h_bf16, w, preferred_element_type=f32)              # (GN, HP) f32
        ah = jnp.dot(a_ref[...], hw.astype(bf16),
                     preferred_element_type=f32)                         # (GN, HP) f32
        b = p_ref[b_row:b_row + 1, :].astype(f32)                        # (1, HP)
        return jnp.maximum(ah + b, 0.0)

    h = graph_conv_relu(x_ref[...],       0 * HP, BIAS0 + 0)
    h = graph_conv_relu(h.astype(bf16),   1 * HP, BIAS0 + 8)
    h = graph_conv_relu(h.astype(bf16),   2 * HP, BIAS0 + 16)

    # Readout: per-graph mean over its N nodes (sublane reduce, lane-dense store).
    out_ref[...] = jnp.mean(h.reshape(G, N, HP), axis=1)                 # (G, HP)


# --------------------------------------------------------------------------- packing
def pack_params(params):
    """Pack W1,W2,W3 and 8-row-aligned b1,b2,b3 into one zero-padded (PROWS, HP) slab."""
    w1, b1, w2, b2, w3, b3 = params
    p = jnp.zeros((PROWS, HP), jnp.float32)
    p = p.at[0 * HP:0 * HP + w1.shape[0], :w1.shape[1]].set(w1)
    p = p.at[1 * HP:1 * HP + w2.shape[0], :w2.shape[1]].set(w2)
    p = p.at[2 * HP:2 * HP + w3.shape[0], :w3.shape[1]].set(w3)
    p = p.at[BIAS0 + 0, :b1.shape[0]].set(b1)
    p = p.at[BIAS0 + 8, :b2.shape[0]].set(b2)
    p = p.at[BIAS0 + 16, :b3.shape[0]].set(b3)
    return p


def prepare_graph_encoder(ahat, params, graphs_per_block=32):
    """One-time (per model / graph structure) packing: block-diagonal normalized
    adjacency for G graphs and the parameter slab, both in bf16."""
    G = graphs_per_block
    N = ahat.shape[0]
    eye_g = jnp.eye(G, dtype=jnp.float32)
    bd = jnp.einsum('gij,gh->gihj',
                    jnp.broadcast_to(ahat, (G, N, N)), eye_g).reshape(G * N, G * N)
    return bd.astype(jnp.bfloat16), pack_params(params).astype(jnp.bfloat16)


# --------------------------------------------------------------------------- wrapper
@functools.partial(jax.jit, static_argnames=("graphs_per_block", "hidden_dim"))
def graph_encoder(ahat_bd, p_packed, feats, *, graphs_per_block, hidden_dim):
    """ahat_bd: (G*N, G*N) bf16 block-diag adjacency (from prepare_graph_encoder);
       p_packed: (PROWS, HP) bf16 parameter slab;
       feats: (B, N, input_dim) f32;  returns (B, hidden_dim) f32."""
    B, N, fin = feats.shape
    G = graphs_per_block
    assert B % G == 0, "batch must be a multiple of graphs_per_block"
    num_blocks = B // G
    GN = G * N
    assert ahat_bd.shape == (GN, GN)

    # Per-call glue: zero-pad features to 128 lanes, stack all graphs, cast bf16.
    x_pad = jnp.zeros((B * N, FP), jnp.bfloat16)
    x_pad = x_pad.at[:, :fin].set(feats.reshape(B * N, fin).astype(jnp.bfloat16))

    kern = functools.partial(graph_encoder_kernel,
                             graphs_per_block=G, nodes_per_graph=N)
    out = pl.pallas_call(
        kern,
        out_shape=jax.ShapeDtypeStruct((B, HP), jnp.float32),
        grid=(num_blocks,),
        in_specs=[
            pl.BlockSpec((GN, GN), lambda i: (0, 0)),      # block-diag Ahat (resident)
            pl.BlockSpec((GN, FP), lambda i: (i, 0)),      # stacked node features
            pl.BlockSpec((PROWS, HP), lambda i: (0, 0)),   # packed params (resident)
        ],
        out_specs=pl.BlockSpec((G, HP), lambda i: (i, 0)),
        compiler_params=pltpu.CompilerParams(
            dimension_semantics=("parallel",)),            # v7x: 2 TCs split the blocks
    )(ahat_bd, x_pad, p_packed)

    return out[:, :hidden_dim]


# --------------------------------------------------------------------------- test glue
def build_normalized_adjacency(n_nodes):
    """Dense Ahat = D_in^{-1/2} A D_out^{-1/2}; deterministic ring graph + self-loops."""
    a = jnp.zeros((n_nodes, n_nodes), jnp.float32)
    src = jnp.arange(n_nodes)
    dst = (src + 1) % n_nodes
    a = a.at[dst, src].set(1.0)                  # ring edges i -> i+1  (A[dst, src] = 1)
    a = a.at[src, src].set(1.0)                  # self-loops (standard DGL practice)
    out_deg = jnp.maximum(a.sum(axis=0), 1.0)    # out-degree of source nodes
    in_deg = jnp.maximum(a.sum(axis=1), 1.0)     # in-degree of destination nodes
    return (in_deg ** -0.5)[:, None] * a * (out_deg ** -0.5)[None, :]


def init_params(key, input_dim, hidden_dim):
    ks = jax.random.split(key, 3)
    dims = [(input_dim, hidden_dim), (hidden_dim, hidden_dim), (hidden_dim, hidden_dim)]
    params = []
    for k, (din, dout) in zip(ks, dims):
        scale = 1.0 / jnp.sqrt(jnp.float32(din))
        w = jax.random.uniform(k, (din, dout), jnp.float32, -scale, scale)
        b = jnp.zeros((dout,), jnp.float32)      # DGL GraphConv bias init = zeros
        params += [w, b]
    return tuple(params)


def reference(ahat, feats, params):
    w1, b1, w2, b2, w3, b3 = params

    def one(f):
        h = jnp.maximum(ahat @ (f @ w1) + b1, 0.0)
        h = jnp.maximum(ahat @ (h @ w2) + b2, 0.0)
        h = jnp.maximum(ahat @ (h @ w3) + b3, 0.0)
        return jnp.mean(h, axis=0)

    return jax.vmap(one)(feats)


if __name__ == "__main__":
    N_NODES, INPUT_DIM, HIDDEN_DIM = 8, 23, 64   # module defaults; small node count
    BATCH = 64                                   # graphs per pallas_call (grid = 2 blocks)
    G_PER_BLOCK = 32                             # GN = 256: fills the v6e/v7x 256x256 MXU

    key = jax.random.PRNGKey(0)
    k_feat, k_param = jax.random.split(key)

    feats = jax.random.normal(k_feat, (BATCH, N_NODES, INPUT_DIM), jnp.float32)
    ahat = build_normalized_adjacency(N_NODES)
    params = init_params(k_param, INPUT_DIM, HIDDEN_DIM)

    # One-time packing (static across calls): block-diag adjacency + param slab (bf16).
    ahat_bd, p_packed = prepare_graph_encoder(ahat, params, graphs_per_block=G_PER_BLOCK)

    emb = jax.block_until_ready(
        graph_encoder(ahat_bd, p_packed, feats,
                      graphs_per_block=G_PER_BLOCK, hidden_dim=HIDDEN_DIM))
    ref = reference(ahat, feats, params)

    assert emb.shape == (BATCH, HIDDEN_DIM)
    # tolerance covers bf16 inputs + bf16 MXU passes vs the f32 reference
    assert jnp.allclose(emb, ref, atol=1e-2, rtol=1e-2), \
        f"max abs err {jnp.max(jnp.abs(emb - ref))}"
    print("KERNEL_OK")
</pallas_src>

<mosaic_0001>
module attributes {stable_mosaic.version = 11 : i64} {
  func.func @graph_encoder_kernel(%arg0: i32, %arg1: memref<256x256xbf16, #tpu.memory_space<vmem>>, %arg2: memref<256x128xbf16, #tpu.memory_space<vmem>>, %arg3: memref<408x128xbf16, #tpu.memory_space<vmem>>, %arg4: memref<32x128xf32, #tpu.memory_space<vmem>>) attributes {dimension_semantics = [#tpu.dimension_semantics<parallel>], iteration_bounds = array<i64: 2>, scalar_prefetch = 0 : i64, scratch_operands = 0 : i64, tpu.core_type = #tpu.core_type<tc>, window_params = [{pipeline_mode = #tpu.pipeline_mode<synchronous>, transform_indices = @transform_0, window_bounds = array<i64: 256, 256>}, {transform_indices = @transform_1, window_bounds = array<i64: 256, 128>}, {pipeline_mode = #tpu.pipeline_mode<synchronous>, transform_indices = @transform_2, window_bounds = array<i64: 408, 128>}, {transform_indices = @transform_3, window_bounds = array<i64: 32, 128>}]} {
    %c0 = arith.constant 0 : index
    %c0_0 = arith.constant 0 : index
    %0 = vector.load %arg2[%c0, %c0_0] : memref<256x128xbf16, #tpu.memory_space<vmem>>, vector<256x128xbf16>
    %c0_1 = arith.constant 0 : index
    %c0_2 = arith.constant 0 : index
    %1 = vector.load %arg3[%c0_1, %c0_2] : memref<408x128xbf16, #tpu.memory_space<vmem>>, vector<128x128xbf16>
    %cst = arith.constant dense<0.000000e+00> : vector<256x128xf32>
    %2 = tpu.matmul %0, %1, %cst {dimension_numbers = #tpu.dot_dimension_numbers<[1], [0], [0], [1], [0, 0, 1, 1], [], []>} : vector<256x128xbf16>, vector<128x128xbf16>, vector<256x128xf32> -> vector<256x128xf32>
    %c0_3 = arith.constant 0 : index
    %c0_4 = arith.constant 0 : index
    %3 = vector.load %arg1[%c0_3, %c0_4] : memref<256x256xbf16, #tpu.memory_space<vmem>>, vector<256x256xbf16>
    %4 = arith.truncf %2 : vector<256x128xf32> to vector<256x128xbf16>
    %cst_5 = arith.constant dense<0.000000e+00> : vector<256x128xf32>
    %5 = tpu.matmul %3, %4, %cst_5 {dimension_numbers = #tpu.dot_dimension_numbers<[1], [0], [0], [1], [0, 0, 1, 1], [], []>} : vector<256x256xbf16>, vector<256x128xbf16>, vector<256x128xf32> -> vector<256x128xf32>
    %c384 = arith.constant 384 : index
    %c0_6 = arith.constant 0 : index
    %6 = vector.load %arg3[%c384, %c0_6] : memref<408x128xbf16, #tpu.memory_space<vmem>>, vector<1x128xbf16>
    %7 = arith.extf %6 : vector<1x128xbf16> to vector<1x128xf32>
    %8 = vector.broadcast %7 : vector<1x128xf32> to vector<256x128xf32>
    %9 = arith.addf %5, %8 : vector<256x128xf32>
    %cst_7 = arith.constant 0.000000e+00 : f32
    %10 = vector.broadcast %cst_7 : f32 to vector<256x128xf32>
    %11 = arith.maximumf %9, %10 : vector<256x128xf32>
    %12 = arith.truncf %11 : vector<256x128xf32> to vector<256x128xbf16>
    %c128 = arith.constant 128 : index
    %c0_8 = arith.constant 0 : index
    %13 = vector.load %arg3[%c128, %c0_8] : memref<408x128xbf16, #tpu.memory_space<vmem>>, vector<128x128xbf16>
    %cst_9 = arith.constant dense<0.000000e+00> : vector<256x128xf32>
    %14 = tpu.matmul %12, %13, %cst_9 {dimension_numbers = #tpu.dot_dimension_numbers<[1], [0], [0], [1], [0, 0, 1, 1], [], []>} : vector<256x128xbf16>, vector<128x128xbf16>, vector<256x128xf32> -> vector<256x128xf32>
    %c0_10 = arith.constant 0 : index
    %c0_11 = arith.constant 0 : index
    %15 = vector.load %arg1[%c0_10, %c0_11] : memref<256x256xbf16, #tpu.memory_space<vmem>>, vector<256x256xbf16>
    %16 = arith.truncf %14 : vector<256x128xf32> to vector<256x128xbf16>
    %cst_12 = arith.constant dense<0.000000e+00> : vector<256x128xf32>
    %17 = tpu.matmul %15, %16, %cst_12 {dimension_numbers = #tpu.dot_dimension_numbers<[1], [0], [0], [1], [0, 0, 1, 1], [], []>} : vector<256x256xbf16>, vector<256x128xbf16>, vector<256x128xf32> -> vector<256x128xf32>
    %c392 = arith.constant 392 : index
    %c0_13 = arith.constant 0 : index
    %18 = vector.load %arg3[%c392, %c0_13] : memref<408x128xbf16, #tpu.memory_space<vmem>>, vector<1x128xbf16>
    %19 = arith.extf %18 : vector<1x128xbf16> to vector<1x128xf32>
    %20 = vector.broadcast %19 : vector<1x128xf32> to vector<256x128xf32>
    %21 = arith.addf %17, %20 : vector<256x128xf32>
    %cst_14 = arith.constant 0.000000e+00 : f32
    %22 = vector.broadcast %cst_14 : f32 to vector<256x128xf32>
    %23 = arith.maximumf %21, %22 : vector<256x128xf32>
    %24 = arith.truncf %23 : vector<256x128xf32> to vector<256x128xbf16>
    %c256 = arith.constant 256 : index
    %c0_15 = arith.constant 0 : index
    %25 = vector.load %arg3[%c256, %c0_15] : memref<408x128xbf16, #tpu.memory_space<vmem>>, vector<128x128xbf16>
    %cst_16 = arith.constant dense<0.000000e+00> : vector<256x128xf32>
    %26 = tpu.matmul %24, %25, %cst_16 {dimension_numbers = #tpu.dot_dimension_numbers<[1], [0], [0], [1], [0, 0, 1, 1], [], []>} : vector<256x128xbf16>, vector<128x128xbf16>, vector<256x128xf32> -> vector<256x128xf32>
    %c0_17 = arith.constant 0 : index
    %c0_18 = arith.constant 0 : index
    %27 = vector.load %arg1[%c0_17, %c0_18] : memref<256x256xbf16, #tpu.memory_space<vmem>>, vector<256x256xbf16>
    %28 = arith.truncf %26 : vector<256x128xf32> to vector<256x128xbf16>
    %cst_19 = arith.constant dense<0.000000e+00> : vector<256x128xf32>
    %29 = tpu.matmul %27, %28, %cst_19 {dimension_numbers = #tpu.dot_dimension_numbers<[1], [0], [0], [1], [0, 0, 1, 1], [], []>} : vector<256x256xbf16>, vector<256x128xbf16>, vector<256x128xf32> -> vector<256x128xf32>
    %c400 = arith.constant 400 : index
    %c0_20 = arith.constant 0 : index
    %30 = vector.load %arg3[%c400, %c0_20] : memref<408x128xbf16, #tpu.memory_space<vmem>>, vector<1x128xbf16>
    %31 = arith.extf %30 : vector<1x128xbf16> to vector<1x128xf32>
    %32 = vector.broadcast %31 : vector<1x128xf32> to vector<256x128xf32>
    %33 = arith.addf %29, %32 : vector<256x128xf32>
    %cst_21 = arith.constant 0.000000e+00 : f32
    %34 = vector.broadcast %cst_21 : f32 to vector<256x128xf32>
    %35 = arith.maximumf %33, %34 : vector<256x128xf32>
    %36 = vector.shape_cast %35 : vector<256x128xf32> to vector<32x8x128xf32>
    %cst_22 = arith.constant dense<0.000000e+00> : vector<32x128xf32>
    %37 = vector.multi_reduction <add>, %36, %cst_22 [1] : vector<32x8x128xf32> to vector<32x128xf32>
    %cst_23 = arith.constant 8.000000e+00 : f32
    %38 = vector.broadcast %cst_23 : f32 to vector<32x128xf32>
    %39 = arith.divf %37, %38 : vector<32x128xf32>
    %c0_24 = arith.constant 0 : index
    %c0_25 = arith.constant 0 : index
    %40 = vector.load %arg4[%c0_24, %c0_25] : memref<32x128xf32, #tpu.memory_space<vmem>>, vector<32x128xf32>
    tpu.vector_store %arg4[%c0_24, %c0_25], %39 {strides = array<i32>} : memref<32x128xf32, #tpu.memory_space<vmem>>, vector<32x128xf32>,
    return
  }
  func.func @transform_0(%arg0: i32) -> (i32, i32) {
    %c0_i32 = arith.constant 0 : i32
    %c0_i32_0 = arith.constant 0 : i32
    %c0_i32_1 = arith.constant 0 : i32
    return %c0_i32, %c0_i32_0 : i32, i32
  }
  func.func @transform_1(%arg0: i32) -> (i32, i32) {
    %c0_i32 = arith.constant 0 : i32
    %c0_i32_0 = arith.constant 0 : i32
    return %arg0, %c0_i32 : i32, i32
  }
  func.func @transform_2(%arg0: i32) -> (i32, i32) {
    %c0_i32 = arith.constant 0 : i32
    %c0_i32_0 = arith.constant 0 : i32
    %c0_i32_1 = arith.constant 0 : i32
    return %c0_i32, %c0_i32_0 : i32, i32
  }
  func.func @transform_3(%arg0: i32) -> (i32, i32) {
    %c0_i32 = arith.constant 0 : i32
    %c0_i32_0 = arith.constant 0 : i32
    return %arg0, %c0_i32 : i32, i32
  }
}

</mosaic_0001>

<llo_original>
// kernel: graph_encoder.1
$region0: #{graph_encoder.1}
  #allocation0 [shape = 'u32[]', space=smem, size = 0x4, offset = 0x4, fixed_abs, tag = 'smem constant byte address 0x4 - core index']
  #allocation1 [shape = 'u32[72,128]{1,0:T(1,128)}', space=vmem, size = 0x9000, scoped, tag = 'internal scratch']
  %s0 = inlined_call_operand.vmem [shape: bf16[256,256], index: 0, kind: input, shape index: {}]
  %s1 = inlined_call_operand.vmem [shape: bf16[512,128], index: 1, kind: input, shape index: {}]
  %s2 = inlined_call_operand.vmem [shape: bf16[408,128], index: 2, kind: input, shape index: {}]
  %s3 = inlined_call_operand.hbm [shape: f32[64,128], index: 3, kind: output, shape index: {}]
  %s4 = sld [smem:[#allocation0]]
  $region45: #{graph_encoder.1} parent=0
    _
  %s6 = ssub.s32 1, %s4
  %s7 = scalar_select 0, %s6, %s4
  $region1: #{graph_encoder.1} parent=0
    #allocation2 [shape = 'u8[32768]{0}', space=vmem, size = 0x8000, scoped, tag = 'output window, operand 0']
    #allocation3 [shape = 's32[2]{0}', space=sflag, size = 0x8, scoped, tag = 'scoped memory for graph_encoder.1']
    %8 = vsyncpa [#allocation3], 0
    %s9 = scalar_lea.sflag [#allocation3], 1
    %10 = vsyncpa %s9, 0
    loop: start=0, step=1, limit=4
    $region2: #{graph_encoder.1} parent=1 // loop_pre_header
      _
    $region3: #{graph_encoder.1} parent=1 // loop_header
      %s12 = sphi 0, %s16
      %p13 = scmp.ge.s32.totalorder %s12, 4
      %s20 = sphi 0, %s20
      %s22 = sphi 0, %s20
      %s23 = sphi 0, %s22
      %s37 = sphi 0, %s23
      %s43 = sphi 0, %s45
      %s46 = sphi 0, %s43
      %s47 = sphi 0, %s46
      %s63 = sphi 0, %s47
      %s67 = sphi 0, %s67
      %s69 = sphi 0, %s67
      %s70 = sphi 0, %s69
      %s84 = sphi 0, %s70
      %s90 = sphi 0, %s92
      %s93 = sphi 0, %s90
      %s94 = sphi 0, %s93
      %s110 = sphi 0, %s94
    $region4: #{graph_encoder.1} parent=1 // loop_header_branch
      %15 = sbr.rel (%p13) target = $region8
    $region5: #{graph_encoder.1} parent=1 // loop_body
      %s17 = ssub.s32 %s12, 1
      %s18 = ssub.s32 %s12, 2
      %s19 = sadd.s32 %s12, 1
      %s21 = sadd.s32 %s20, 1
      %p24 = scmp.eq.s32.totalorder %s12, 1
      %p25 = scmp.ne.s32.totalorder %s20, %s22
      %p26 = scmp.eq.s32.totalorder %s12, 0
      %p27 = por %p25, %p26
      %p28 = scmp.ne.s32.totalorder %s20, %s22
      %p29 = scmp.eq.s32.totalorder %s17, 1
      %p30 = por %p28, %p29
      %p31 = scmp.ne.s32.totalorder %s22, %s23
      %p32 = scmp.eq.s32.totalorder %s17, 0
      %p33 = por %p31, %p32
      %p34 = scmp.ne.s32.totalorder %s22, %s23
      %p35 = scmp.eq.s32.totalorder %s18, 1
      %p36 = por %p34, %p35
      %p38 = scmp.ne.s32.totalorder %s23, %s37
      %p39 = scmp.eq.s32.totalorder %s18, 0
      %p40 = por %p38, %p39
      %s41 = ssub.s32 %s12, %s19
      %p42 = scmp.eq.s32.totalorder %s41, 0
      %s44 = sadd.s32 %s43, 1
      %s45 = scalar_select %p42, %s43, %s44
      %p48 = pneg %p42
      %p49 = scmp.eq.s32.totalorder %s12, 1
      %p50 = por %p48, %p49
      %p51 = scmp.ne.s32.totalorder %s43, %s46
      %p52 = scmp.eq.s32.totalorder %s12, 0
      %p53 = por %p51, %p52
      %p54 = scmp.ne.s32.totalorder %s43, %s46
      %p55 = scmp.eq.s32.totalorder %s17, 1
      %p56 = por %p54, %p55
      %p57 = scmp.ne.s32.totalorder %s46, %s47
      %p58 = scmp.eq.s32.totalorder %s17, 0
      %p59 = por %p57, %p58
      %p60 = scmp.ne.s32.totalorder %s46, %s47
      %p61 = scmp.eq.s32.totalorder %s18, 1
      %p62 = por %p60, %p61
      %p64 = scmp.ne.s32.totalorder %s47, %s63
      %p65 = scmp.eq.s32.totalorder %s18, 0
      %p66 = por %p64, %p65
      %s68 = sadd.s32 %s67, 1
      %p71 = scmp.eq.s32.totalorder %s12, 1
      %p72 = scmp.ne.s32.totalorder %s67, %s69
      %p73 = scmp.eq.s32.totalorder %s12, 0
      %p74 = por %p72, %p73
      %p75 = scmp.ne.s32.totalorder %s67, %s69
      %p76 = scmp.eq.s32.totalorder %s17, 1
      %p77 = por %p75, %p76
      %p78 = scmp.ne.s32.totalorder %s69, %s70
      %p79 = scmp.eq.s32.totalorder %s17, 0
      %p80 = por %p78, %p79
      %p81 = scmp.ne.s32.totalorder %s69, %s70
      %p82 = scmp.eq.s32.totalorder %s18, 1
      %p83 = por %p81, %p82
      %p85 = scmp.ne.s32.totalorder %s70, %s84
      %p86 = scmp.eq.s32.totalorder %s18, 0
      %p87 = por %p85, %p86
      %s88 = ssub.s32 %s12, %s19
      %p89 = scmp.eq.s32.totalorder %s88, 0
      %s91 = sadd.s32 %s90, 1
      %s92 = scalar_select %p89, %s90, %s91
      %p95 = pneg %p89
      %p96 = scmp.eq.s32.totalorder %s12, 1
      %p97 = por %p95, %p96
      %p98 = scmp.ne.s32.totalorder %s90, %s93
      %p99 = scmp.eq.s32.totalorder %s12, 0
      %p100 = por %p98, %p99
      %p101 = scmp.ne.s32.totalorder %s90, %s93
      %p102 = scmp.eq.s32.totalorder %s17, 1
      %p103 = por %p101, %p102
      %p104 = scmp.ne.s32.totalorder %s93, %s94
      %p105 = scmp.eq.s32.totalorder %s17, 0
      %p106 = por %p104, %p105
      %p107 = scmp.ne.s32.totalorder %s93, %s94
      %p108 = scmp.eq.s32.totalorder %s18, 1
      %p109 = por %p107, %p108
      %p111 = scmp.ne.s32.totalorder %s94, %s110
      %p112 = scmp.eq.s32.totalorder %s18, 0
      %p113 = por %p111, %p112
      %p114 = scmp.le.s32.totalorder 1, %s12
      %p115 = scmp.lt.s32.totalorder %s12, 3
      %p116 = pnand %p114, %p115
      %p117 = pneg %p116
      // Predicated region
      $region9: #{graph_encoder.1} parent=5 // pred_check
        _
      $region10: #{graph_encoder.1} parent=5 // pred_check_branch
        %119 = sbr.rel (%p116) target = $region12
      $region11: #{graph_encoder.1} parent=5 // pred_region
        %s120 = ssub.s32 %s12, 1
        // Predicated region
        $region13: #{graph_encoder.1} parent=11 // pred_check
          %p121 = pneg %p33
        $region14: #{graph_encoder.1} parent=11 // pred_check_branch
          %123 = sbr.rel (%p121) target = $region16
        $region15: #{graph_encoder.1} parent=11 // pred_region
          _
        $region16: #{graph_encoder.1} parent=11 // pred_fallthru
          _
        // Predicated region
        $region17: #{graph_encoder.1} parent=11 // pred_check
          %p124 = pneg %p80
        $region18: #{graph_encoder.1} parent=11 // pred_check_branch
          %126 = sbr.rel (%p124) target = $region20
        $region19: #{graph_encoder.1} parent=11 // pred_region
          _
        $region20: #{graph_encoder.1} parent=11 // pred_fallthru
          _
      $region12: #{graph_encoder.1} parent=5 // pred_fallthru
        _
      %p127 = scmp.lt.s32.totalorder %s12, 2
      // Predicated region
      $region21: #{graph_encoder.1} parent=5 // pred_check
        %p128 = pneg %p127
      $region22: #{graph_encoder.1} parent=5 // pred_check_branch
        %130 = sbr.rel (%p128) target = $region24
      $region23: #{graph_encoder.1} parent=5 // pred_region
        // Predicated region
        $region25: #{graph_encoder.1} parent=23 // pred_check
          %p131 = pneg %p53
        $region26: #{graph_encoder.1} parent=23 // pred_check_branch
          %133 = sbr.rel (%p131) target = $region28
        $region27: #{graph_encoder.1} parent=23 // pred_region
          %s134 = smul.u32 32, %s12
          %p135 = scmp.lt.s32.totalorder %s134, 63
          %s136 = scalar_select %p135, %s134, 63
          %s137 = smul.addr %s136, 4
          %s138 = scalar_lea.vmem %s1, %s137
          %s139 = smul.u32 32, %s12
        $region28: #{graph_encoder.1} parent=23 // pred_fallthru
          _
      $region24: #{graph_encoder.1} parent=5 // pred_fallthru
        _
      %p140 = scmp.le.s32.totalorder 1, %s12
      %p141 = scmp.lt.s32.totalorder %s12, 3
      %p142 = pnand %p140, %p141
      %p143 = pneg %p142
      // Predicated region
      $region29: #{graph_encoder.1} parent=5 // pred_check
        _
      $region30: #{graph_encoder.1} parent=5 // pred_check_branch
        %145 = sbr.rel (%p142) target = $region32
      $region31: #{graph_encoder.1} parent=5 // pred_region
        %s146 = ssub.s32 %s12, 1
        %p147 = pneg %p33
        %p148 = pneg %p30
        %s149 = smul.u32 32, %s17
        %p150 = scmp.lt.s32.totalorder %s149, 63
        %s151 = scalar_select %p150, %s149, 63
        %s152 = smul.addr %s151, 4
        %s153 = scalar_lea.vmem %s1, %s152
        %p154 = pneg %p59
        %p155 = pneg %p56
        %p156 = pneg %p80
        %p157 = pneg %p77
        %p158 = pneg %p106
        %p159 = pneg %p103
        %s160 = sand.u32 %s93, 1
        %s161 = scalar_lea.sflag [#allocation3], %s160
        %s162 = sand.u32 %s93, 1
        %s163 = smul.addr %s162, 32
        %s164 = scalar_lea.vmem [#allocation2], %s163
        %s165 = smul.u32 32, %s17
        %p166 = scmp.lt.s32.totalorder %s165, 63
        %s167 = scalar_select %p166, %s165, 63
        %s168 = smul.addr %s167, 4
        %s169 = scalar_lea.vmem %s1, %s168
        %s170 = smul.u32 32, %s17
        %s171 = smul.u32 4, %s17
        %v172 = vld [vmem:[%s169] sm:$0xf]
        %v173 = vld [vmem:[%s169 + $0x4] sm:$0xf]
        %v174 = vld [vmem:[%s169 + $0x8] sm:$0xf]
        %v175 = vld [vmem:[%s169 + $0xc] sm:$0xf]
        %v176 = vld [vmem:[%s169 + $0x10] sm:$0xf]
        %v177 = vld [vmem:[%s169 + $0x14] sm:$0xf]
        %v178 = vld [vmem:[%s169 + $0x18] sm:$0xf]
        %v179 = vld [vmem:[%s169 + $0x1c] sm:$0xf]
        %v180 = vld [vmem:[%s169 + $0x20] sm:$0xf]
        %v181 = vld [vmem:[%s169 + $0x24] sm:$0xf]
        %v182 = vld [vmem:[%s169 + $0x28] sm:$0xf]
        %v183 = vld [vmem:[%s169 + $0x2c] sm:$0xf]
        %v184 = vld [vmem:[%s169 + $0x30] sm:$0xf]
        %v185 = vld [vmem:[%s169 + $0x34] sm:$0xf]
        %v186 = vld [vmem:[%s169 + $0x38] sm:$0xf]
        %v187 = vld [vmem:[%s169 + $0x3c] sm:$0xf]
        %v188 = vld [vmem:[%s169 + $0x40] sm:$0xf]
        %v189 = vld [vmem:[%s169 + $0x44] sm:$0xf]
        %v190 = vld [vmem:[%s169 + $0x48] sm:$0xf]
        %v191 = vld [vmem:[%s169 + $0x4c] sm:$0xf]
        %v192 = vld [vmem:[%s169 + $0x50] sm:$0xf]
        %v193 = vld [vmem:[%s169 + $0x54] sm:$0xf]
        %v194 = vld [vmem:[%s169 + $0x58] sm:$0xf]
        %v195 = vld [vmem:[%s169 + $0x5c] sm:$0xf]
        %v196 = vld [vmem:[%s169 + $0x60] sm:$0xf]
        %v197 = vld [vmem:[%s169 + $0x64] sm:$0xf]
        %v198 = vld [vmem:[%s169 + $0x68] sm:$0xf]
        %v199 = vld [vmem:[%s169 + $0x6c] sm:$0xf]
        %v200 = vld [vmem:[%s169 + $0x70] sm:$0xf]
        %v201 = vld [vmem:[%s169 + $0x74] sm:$0xf]
        %v202 = vld [vmem:[%s169 + $0x78] sm:$0xf]
        %v203 = vld [vmem:[%s169 + $0x7c] sm:$0xf]
        %v204 = vld [vmem:[%s2] sm:$0xf]
        %v205 = vld [vmem:[%s2 + $0x4] sm:$0xf]
        %v206 = vld [vmem:[%s2 + $0x8] sm:$0xf]
        %v207 = vld [vmem:[%s2 + $0xc] sm:$0xf]
        %v208 = vld [vmem:[%s2 + $0x10] sm:$0xf]
        %v209 = vld [vmem:[%s2 + $0x14] sm:$0xf]
        %v210 = vld [vmem:[%s2 + $0x18] sm:$0xf]
        %v211 = vld [vmem:[%s2 + $0x1c] sm:$0xf]
        %v212 = vld [vmem:[%s2 + $0x20] sm:$0xf]
        %v213 = vld [vmem:[%s2 + $0x24] sm:$0xf]
        %v214 = vld [vmem:[%s2 + $0x28] sm:$0xf]
        %v215 = vld [vmem:[%s2 + $0x2c] sm:$0xf]
        %v216 = vld [vmem:[%s2 + $0x30] sm:$0xf]
        %v217 = vld [vmem:[%s2 + $0x34] sm:$0xf]
        %v218 = vld [vmem:[%s2 + $0x38] sm:$0xf]
        %v219 = vld [vmem:[%s2 + $0x3c] sm:$0xf]
        %v252 = vunpack.c.l.b16 %v172
        %v253 = vunpack.c.l.b16 %v173
        %v254 = vunpack.c.l.b16 %v174
        %v255 = vunpack.c.l.b16 %v175
        %v256 = vunpack.c.l.b16 %v176
        %v257 = vunpack.c.l.b16 %v177
        %v258 = vunpack.c.l.b16 %v178
        %v259 = vunpack.c.l.b16 %v179
        %v260 = vunpack.c.l.b16 %v180
        %v261 = vunpack.c.l.b16 %v181
        %v262 = vunpack.c.l.b16 %v182
        %v263 = vunpack.c.l.b16 %v183
        %v264 = vunpack.c.l.b16 %v184
        %v265 = vunpack.c.l.b16 %v185
        %v266 = vunpack.c.l.b16 %v186
        %v267 = vunpack.c.l.b16 %v187
        %v268 = vunpack.c.l.b16 %v188
        %v269 = vunpack.c.l.b16 %v189
        %v270 = vunpack.c.l.b16 %v190
        %v271 = vunpack.c.l.b16 %v191
        %v272 = vunpack.c.l.b16 %v192
        %v273 = vunpack.c.l.b16 %v193
        %v274 = vunpack.c.l.b16 %v194
        %v275 = vunpack.c.l.b16 %v195
        %v276 = vunpack.c.l.b16 %v196
        %v277 = vunpack.c.l.b16 %v197
        %v278 = vunpack.c.l.b16 %v198
        %v279 = vunpack.c.l.b16 %v199
        %v280 = vunpack.c.l.b16 %v200
        %v281 = vunpack.c.l.b16 %v201
        %v282 = vunpack.c.l.b16 %v202
        %v283 = vunpack.c.l.b16 %v203
        %v284 = vpack.c.b16 %v253, %v252
        %v285 = vpack.c.b16 %v255, %v254
        %v286 = vpack.c.b16 %v257, %v256
        %v287 = vpack.c.b16 %v259, %v258
        %v288 = vpack.c.b16 %v261, %v260
        %v289 = vpack.c.b16 %v263, %v262
        %v290 = vpack.c.b16 %v265, %v264
        %v291 = vpack.c.b16 %v267, %v266
        %v292 = vpack.c.b16 %v269, %v268
        %v293 = vpack.c.b16 %v271, %v270
        %v294 = vpack.c.b16 %v273, %v272
        %v295 = vpack.c.b16 %v275, %v274
        %v296 = vpack.c.b16 %v277, %v276
        %v297 = vpack.c.b16 %v279, %v278
        %v298 = vpack.c.b16 %v281, %v280
        %v299 = vpack.c.b16 %v283, %v282
        %v332 = vunpack.c.l.b16 %v204
        %v333 = vunpack.c.l.b16 %v205
        %v334 = vunpack.c.l.b16 %v206
        %v335 = vunpack.c.l.b16 %v207
        %v336 = vunpack.c.l.b16 %v208
        %v337 = vunpack.c.l.b16 %v209
        %v338 = vunpack.c.l.b16 %v210
        %v339 = vunpack.c.l.b16 %v211
        %v340 = vunpack.c.l.b16 %v212
        %v341 = vunpack.c.l.b16 %v213
        %v342 = vunpack.c.l.b16 %v214
        %v343 = vunpack.c.l.b16 %v215
        %v344 = vunpack.c.l.b16 %v216
        %v345 = vunpack.c.l.b16 %v217
        %v346 = vunpack.c.l.b16 %v218
        %v347 = vunpack.c.l.b16 %v219
        %v348 = vpack.c.b16 %v333, %v332
        %v349 = vpack.c.b16 %v335, %v334
        %v350 = vpack.c.b16 %v337, %v336
        %v351 = vpack.c.b16 %v339, %v338
        %v352 = vpack.c.b16 %v341, %v340
        %v353 = vpack.c.b16 %v343, %v342
        %v354 = vpack.c.b16 %v345, %v344
        %v355 = vpack.c.b16 %v347, %v346
        %364 = vmatpush.bf16.msra.mxu0 %v355
        %365 = vmatpush.bf16.msra.mxu0 %v354
        %366 = vmatpush.bf16.msra.mxu0 %v353
        %367 = vmatpush.bf16.msra.mxu0 %v352
        %368 = vmatpush.bf16.msra.mxu0 %v351
        %369 = vmatpush.bf16.msra.mxu0 %v350
        %370 = vmatpush.bf16.msra.mxu0 %v349
        %371 = vmatpush.bf16.msra.mxu0 %v348
        %372 = vmatmul.bf16.gmra.mxu0 %v284
        %v373 = vpop.f32.mrf.mxu0
        %v374 = vadd.f32 0.0, %v373
        %v375 = vpop.f32.mrf.mxu0
        %v376 = vadd.f32 0.0, %v375
        %377 = vmatmul.bf16.gmra.mxu0 %v285
        %v378 = vpop.f32.mrf.mxu0
        %v379 = vadd.f32 0.0, %v378
        %v380 = vpop.f32.mrf.mxu0
        %v381 = vadd.f32 0.0, %v380
        %382 = vmatmul.bf16.gmra.mxu0 %v286
        %v383 = vpop.f32.mrf.mxu0
        %v384 = vadd.f32 0.0, %v383
        %v385 = vpop.f32.mrf.mxu0
        %v386 = vadd.f32 0.0, %v385
        %387 = vmatmul.bf16.gmra.mxu0 %v287
        %v388 = vpop.f32.mrf.mxu0
        %v389 = vadd.f32 0.0, %v388
        %v390 = vpop.f32.mrf.mxu0
        %v391 = vadd.f32 0.0, %v390
        %392 = vmatmul.bf16.gmra.mxu0 %v288
        %v393 = vpop.f32.mrf.mxu0
        %v394 = vadd.f32 0.0, %v393
        %v395 = vpop.f32.mrf.mxu0
        %v396 = vadd.f32 0.0, %v395
        %397 = vmatmul.bf16.gmra.mxu0 %v289
        %v398 = vpop.f32.mrf.mxu0
        %v399 = vadd.f32 0.0, %v398
        %v400 = vpop.f32.mrf.mxu0
        %v401 = vadd.f32 0.0, %v400
        %402 = vmatmul.bf16.gmra.mxu0 %v290
        %v403 = vpop.f32.mrf.mxu0
        %v404 = vadd.f32 0.0, %v403
        %v405 = vpop.f32.mrf.mxu0
        %v406 = vadd.f32 0.0, %v405
        %407 = vmatmul.bf16.gmra.mxu0 %v291
        %v408 = vpop.f32.mrf.mxu0
        %v409 = vadd.f32 0.0, %v408
        %v410 = vpop.f32.mrf.mxu0
        %v411 = vadd.f32 0.0, %v410
        %412 = vmatmul.bf16.gmra.mxu0 %v292
        %v413 = vpop.f32.mrf.mxu0
        %v414 = vadd.f32 0.0, %v413
        %v415 = vpop.f32.mrf.mxu0
        %v416 = vadd.f32 0.0, %v415
        %417 = vmatmul.bf16.gmra.mxu0 %v293
        %v418 = vpop.f32.mrf.mxu0
        %v419 = vadd.f32 0.0, %v418
        %v420 = vpop.f32.mrf.mxu0
        %v421 = vadd.f32 0.0, %v420
        %422 = vmatmul.bf16.gmra.mxu0 %v294
        %v423 = vpop.f32.mrf.mxu0
        %v424 = vadd.f32 0.0, %v423
        %v425 = vpop.f32.mrf.mxu0
        %v426 = vadd.f32 0.0, %v425
        %427 = vmatmul.bf16.gmra.mxu0 %v295
        %v428 = vpop.f32.mrf.mxu0
        %v429 = vadd.f32 0.0, %v428
        %v430 = vpop.f32.mrf.mxu0
        %v431 = vadd.f32 0.0, %v430
        %432 = vmatmul.bf16.gmra.mxu0 %v296
        %v433 = vpop.f32.mrf.mxu0
        %v434 = vadd.f32 0.0, %v433
        %v435 = vpop.f32.mrf.mxu0
        %v436 = vadd.f32 0.0, %v435
        %437 = vmatmul.bf16.gmra.mxu0 %v297
        %v438 = vpop.f32.mrf.mxu0
        %v439 = vadd.f32 0.0, %v438
        %v440 = vpop.f32.mrf.mxu0
        %v441 = vadd.f32 0.0, %v440
        %442 = vmatmul.bf16.gmra.mxu0 %v298
        %v443 = vpop.f32.mrf.mxu0
        %v444 = vadd.f32 0.0, %v443
        %v445 = vpop.f32.mrf.mxu0
        %v446 = vadd.f32 0.0, %v445
        %447 = vmatmul.bf16.gmra.mxu0 %v299
        %v448 = vpop.f32.mrf.mxu0
        %v449 = vadd.f32 0.0, %v448
        %v450 = vpop.f32.mrf.mxu0
        %v451 = vadd.f32 0.0, %v450
        %452 = vdwg.mxu0
        %v453 = vld [vmem:[%s0] sm:$0xff]
        %v454 = vld [vmem:[%s0 + $0x8] sm:$0xff]
        %v455 = vld [vmem:[%s0 + $0x10] sm:$0xff]
        %v456 = vld [vmem:[%s0 + $0x18] sm:$0xff]
        %v457 = vld [vmem:[%s0 + $0x20] sm:$0xff]
        %v458 = vld [vmem:[%s0 + $0x28] sm:$0xff]
        %v459 = vld [vmem:[%s0 + $0x30] sm:$0xff]
        %v460 = vld [vmem:[%s0 + $0x38] sm:$0xff]
        %v461 = vld [vmem:[%s0 + $0x40] sm:$0xff]
        %v462 = vld [vmem:[%s0 + $0x48] sm:$0xff]
        %v463 = vld [vmem:[%s0 + $0x50] sm:$0xff]
        %v464 = vld [vmem:[%s0 + $0x58] sm:$0xff]
        %v465 = vld [vmem:[%s0 + $0x60] sm:$0xff]
        %v466 = vld [vmem:[%s0 + $0x68] sm:$0xff]
        %v467 = vld [vmem:[%s0 + $0x70] sm:$0xff]
        %v468 = vld [vmem:[%s0 + $0x78] sm:$0xff]
        %v469 = vld [vmem:[%s0 + $0x80] sm:$0xff]
        %v470 = vld [vmem:[%s0 + $0x88] sm:$0xff]
        %v471 = vld [vmem:[%s0 + $0x90] sm:$0xff]
        %v472 = vld [vmem:[%s0 + $0x98] sm:$0xff]
        %v473 = vld [vmem:[%s0 + $0xa0] sm:$0xff]
        %v474 = vld [vmem:[%s0 + $0xa8] sm:$0xff]
        %v475 = vld [vmem:[%s0 + $0xb0] sm:$0xff]
        %v476 = vld [vmem:[%s0 + $0xb8] sm:$0xff]
        %v477 = vld [vmem:[%s0 + $0xc0] sm:$0xff]
        %v478 = vld [vmem:[%s0 + $0xc8] sm:$0xff]
        %v479 = vld [vmem:[%s0 + $0xd0] sm:$0xff]
        %v480 = vld [vmem:[%s0 + $0xd8] sm:$0xff]
        %v481 = vld [vmem:[%s0 + $0xe0] sm:$0xff]
        %v482 = vld [vmem:[%s0 + $0xe8] sm:$0xff]
        %v483 = vld [vmem:[%s0 + $0xf0] sm:$0xff]
        %v484 = vld [vmem:[%s0 + $0xf8] sm:$0xff]
        %v485 = vpack.c.bf16 %v376, %v374
        %v486 = vpack.c.bf16 %v381, %v379
        %v487 = vpack.c.bf16 %v386, %v384
        %v488 = vpack.c.bf16 %v391, %v389
        %v489 = vpack.c.bf16 %v396, %v394
        %v490 = vpack.c.bf16 %v401, %v399
        %v491 = vpack.c.bf16 %v406, %v404
        %v492 = vpack.c.bf16 %v411, %v409
        %v493 = vpack.c.bf16 %v416, %v414
        %v494 = vpack.c.bf16 %v421, %v419
        %v495 = vpack.c.bf16 %v426, %v424
        %v496 = vpack.c.bf16 %v431, %v429
        %v497 = vpack.c.bf16 %v436, %v434
        %v498 = vpack.c.bf16 %v441, %v439
        %v499 = vpack.c.bf16 %v446, %v444
        %v500 = vpack.c.bf16 %v451, %v449
        %v501 = vld [vmem:[%s2 + $0xc0] sm:$0x1]
        %v502 = vunpack.c.l.bf16 %v501
        %v503 = vperm.slane %v502, 0
        %v536 = vunpack.c.l.b16 %v453
        %v537 = vunpack.c.h.b16 %v453
        %v538 = vunpack.c.l.b16 %v454
        %v539 = vunpack.c.h.b16 %v454
        %v540 = vunpack.c.l.b16 %v455
        %v541 = vunpack.c.h.b16 %v455
        %v542 = vunpack.c.l.b16 %v456
        %v543 = vunpack.c.h.b16 %v456
        %v544 = vunpack.c.l.b16 %v457
        %v545 = vunpack.c.h.b16 %v457
        %v546 = vunpack.c.l.b16 %v458
        %v547 = vunpack.c.h.b16 %v458
        %v548 = vunpack.c.l.b16 %v459
        %v549 = vunpack.c.h.b16 %v459
        %v550 = vunpack.c.l.b16 %v460
        %v551 = vunpack.c.h.b16 %v460
        %v552 = vunpack.c.l.b16 %v461
        %v553 = vunpack.c.h.b16 %v461
        %v554 = vunpack.c.l.b16 %v462
        %v555 = vunpack.c.h.b16 %v462
        %v556 = vunpack.c.l.b16 %v463
        %v557 = vunpack.c.h.b16 %v463
        %v558 = vunpack.c.l.b16 %v464
        %v559 = vunpack.c.h.b16 %v464
        %v560 = vunpack.c.l.b16 %v465
        %v561 = vunpack.c.h.b16 %v465
        %v562 = vunpack.c.l.b16 %v466
        %v563 = vunpack.c.h.b16 %v466
        %v564 = vunpack.c.l.b16 %v467
        %v565 = vunpack.c.h.b16 %v467
        %v566 = vunpack.c.l.b16 %v468
        %v567 = vunpack.c.h.b16 %v468
        %v568 = vunpack.c.l.b16 %v469
        %v569 = vunpack.c.h.b16 %v469
        %v570 = vunpack.c.l.b16 %v470
        %v571 = vunpack.c.h.b16 %v470
        %v572 = vunpack.c.l.b16 %v471
        %v573 = vunpack.c.h.b16 %v471
        %v574 = vunpack.c.l.b16 %v472
        %v575 = vunpack.c.h.b16 %v472
        %v576 = vunpack.c.l.b16 %v473
        %v577 = vunpack.c.h.b16 %v473
        %v578 = vunpack.c.l.b16 %v474
        %v579 = vunpack.c.h.b16 %v474
        %v580 = vunpack.c.l.b16 %v475
        %v581 = vunpack.c.h.b16 %v475
        %v582 = vunpack.c.l.b16 %v476
        %v583 = vunpack.c.h.b16 %v476
        %v584 = vunpack.c.l.b16 %v477
        %v585 = vunpack.c.h.b16 %v477
        %v586 = vunpack.c.l.b16 %v478
        %v587 = vunpack.c.h.b16 %v478
        %v588 = vunpack.c.l.b16 %v479
        %v589 = vunpack.c.h.b16 %v479
        %v590 = vunpack.c.l.b16 %v480
        %v591 = vunpack.c.h.b16 %v480
        %v592 = vunpack.c.l.b16 %v481
        %v593 = vunpack.c.h.b16 %v481
        %v594 = vunpack.c.l.b16 %v482
        %v595 = vunpack.c.h.b16 %v482
        %v596 = vunpack.c.l.b16 %v483
        %v597 = vunpack.c.h.b16 %v483
        %v598 = vunpack.c.l.b16 %v484
        %v599 = vunpack.c.h.b16 %v484
        %v600 = vpack.c.b16 %v538, %v536
        %v601 = vpack.c.b16 %v539, %v537
        %v602 = vpack.c.b16 %v542, %v540
        %v603 = vpack.c.b16 %v543, %v541
        %v604 = vpack.c.b16 %v546, %v544
        %v605 = vpack.c.b16 %v547, %v545
        %v606 = vpack.c.b16 %v550, %v548
        %v607 = vpack.c.b16 %v551, %v549
        %v608 = vpack.c.b16 %v554, %v552
        %v609 = vpack.c.b16 %v555, %v553
        %v610 = vpack.c.b16 %v558, %v556
        %v611 = vpack.c.b16 %v559, %v557
        %v612 = vpack.c.b16 %v562, %v560
        %v613 = vpack.c.b16 %v563, %v561
        %v614 = vpack.c.b16 %v566, %v564
        %v615 = vpack.c.b16 %v567, %v565
        %v616 = vpack.c.b16 %v570, %v568
        %v617 = vpack.c.b16 %v571, %v569
        %v618 = vpack.c.b16 %v574, %v572
        %v619 = vpack.c.b16 %v575, %v573
        %v620 = vpack.c.b16 %v578, %v576
        %v621 = vpack.c.b16 %v579, %v577
        %v622 = vpack.c.b16 %v582, %v580
        %v623 = vpack.c.b16 %v583, %v581
        %v624 = vpack.c.b16 %v586, %v584
        %v625 = vpack.c.b16 %v587, %v585
        %v626 = vpack.c.b16 %v590, %v588
        %v627 = vpack.c.b16 %v591, %v589
        %v628 = vpack.c.b16 %v594, %v592
        %v629 = vpack.c.b16 %v595, %v593
        %v630 = vpack.c.b16 %v598, %v596
        %v631 = vpack.c.b16 %v599, %v597
        %664 = vmatpush.bf16.msra.mxu0 %v492
        %665 = vmatpush.bf16.msra.mxu0 %v491
        %666 = vmatpush.bf16.msra.mxu0 %v490
        %667 = vmatpush.bf16.msra.mxu0 %v489
        %668 = vmatpush.bf16.msra.mxu0 %v488
        %669 = vmatpush.bf16.msra.mxu0 %v487
        %670 = vmatpush.bf16.msra.mxu0 %v486
        %671 = vmatpush.bf16.msra.mxu0 %v485
        %672 = vmatmul.bf16.gmra.mxu0 %v600
        %v673 = vpop.f32.mrf.mxu0
        %v674 = vadd.f32 %v503, %v673
        %v675 = vpop.f32.mrf.mxu0
        %v676 = vadd.f32 %v503, %v675
        %677 = vmatmul.bf16.gmra.mxu0 %v602
        %v678 = vpop.f32.mrf.mxu0
        %v679 = vadd.f32 %v503, %v678
        %v680 = vpop.f32.mrf.mxu0
        %v681 = vadd.f32 %v503, %v680
        %682 = vmatmul.bf16.gmra.mxu0 %v604
        %v683 = vpop.f32.mrf.mxu0
        %v684 = vadd.f32 %v503, %v683
        %v685 = vpop.f32.mrf.mxu0
        %v686 = vadd.f32 %v503, %v685
        %687 = vmatmul.bf16.gmra.mxu0 %v606
        %v688 = vpop.f32.mrf.mxu0
        %v689 = vadd.f32 %v503, %v688
        %v690 = vpop.f32.mrf.mxu0
        %v691 = vadd.f32 %v503, %v690
        %692 = vmatmul.bf16.gmra.mxu0 %v608
        %v693 = vpop.f32.mrf.mxu0
        %v694 = vadd.f32 %v503, %v693
        %v695 = vpop.f32.mrf.mxu0
        %v696 = vadd.f32 %v503, %v695
        %697 = vmatmul.bf16.gmra.mxu0 %v610
        %v698 = vpop.f32.mrf.mxu0
        %v699 = vadd.f32 %v503, %v698
        %v700 = vpop.f32.mrf.mxu0
        %v701 = vadd.f32 %v503, %v700
        %702 = vmatmul.bf16.gmra.mxu0 %v612
        %v703 = vpop.f32.mrf.mxu0
        %v704 = vadd.f32 %v503, %v703
        %v705 = vpop.f32.mrf.mxu0
        %v706 = vadd.f32 %v503, %v705
        %707 = vmatmul.bf16.gmra.mxu0 %v614
        %v708 = vpop.f32.mrf.mxu0
        %v709 = vadd.f32 %v503, %v708
        %v710 = vpop.f32.mrf.mxu0
        %v711 = vadd.f32 %v503, %v710
        %712 = vmatmul.bf16.gmra.mxu0 %v616
        %v713 = vpop.f32.mrf.mxu0
        %v714 = vadd.f32 %v503, %v713
        %v715 = vpop.f32.mrf.mxu0
        %v716 = vadd.f32 %v503, %v715
        %717 = vmatmul.bf16.gmra.mxu0 %v618
        %v718 = vpop.f32.mrf.mxu0
        %v719 = vadd.f32 %v503, %v718
        %v720 = vpop.f32.mrf.mxu0
        %v721 = vadd.f32 %v503, %v720
        %722 = vmatmul.bf16.gmra.mxu0 %v620
        %v723 = vpop.f32.mrf.mxu0
        %v724 = vadd.f32 %v503, %v723
        %v725 = vpop.f32.mrf.mxu0
        %v726 = vadd.f32 %v503, %v725
        %727 = vmatmul.bf16.gmra.mxu0 %v622
        %v728 = vpop.f32.mrf.mxu0
        %v729 = vadd.f32 %v503, %v728
        %v730 = vpop.f32.mrf.mxu0
        %v731 = vadd.f32 %v503, %v730
        %732 = vmatmul.bf16.gmra.mxu0 %v624
        %v733 = vpop.f32.mrf.mxu0
        %v734 = vadd.f32 %v503, %v733
        %v735 = vpop.f32.mrf.mxu0
        %v736 = vadd.f32 %v503, %v735
        %737 = vmatmul.bf16.gmra.mxu0 %v626
        %v738 = vpop.f32.mrf.mxu0
        %v739 = vadd.f32 %v503, %v738
        %v740 = vpop.f32.mrf.mxu0
        %v741 = vadd.f32 %v503, %v740
        %742 = vmatmul.bf16.gmra.mxu0 %v628
        %v743 = vpop.f32.mrf.mxu0
        %v744 = vadd.f32 %v503, %v743
        %v745 = vpop.f32.mrf.mxu0
        %v746 = vadd.f32 %v503, %v745
        %747 = vmatmul.bf16.gmra.mxu0 %v630
        %v748 = vpop.f32.mrf.mxu0
        %v749 = vadd.f32 %v503, %v748
        %v750 = vpop.f32.mrf.mxu0
        %v751 = vadd.f32 %v503, %v750
        %752 = vdwg.mxu0
        %753 = vmatpush.bf16.msra.mxu0 %v500
        %754 = vmatpush.bf16.msra.mxu0 %v499
        %755 = vmatpush.bf16.msra.mxu0 %v498
        %756 = vmatpush.bf16.msra.mxu0 %v497
        %757 = vmatpush.bf16.msra.mxu0 %v496
        %758 = vmatpush.bf16.msra.mxu0 %v495
        %759 = vmatpush.bf16.msra.mxu0 %v494
        %760 = vmatpush.bf16.msra.mxu0 %v493
        %761 = vmatmul.bf16.gmra.mxu0 %v601
        %v762 = vpop.f32.mrf.mxu0
        %v763 = vadd.f32 %v674, %v762
        %v764 = vpop.f32.mrf.mxu0
        %v765 = vadd.f32 %v676, %v764
        %766 = vmatmul.bf16.gmra.mxu0 %v603
        %v767 = vpop.f32.mrf.mxu0
        %v768 = vadd.f32 %v679, %v767
        %v769 = vpop.f32.mrf.mxu0
        %v770 = vadd.f32 %v681, %v769
        %771 = vmatmul.bf16.gmra.mxu0 %v605
        %v772 = vpop.f32.mrf.mxu0
        %v773 = vadd.f32 %v684, %v772
        %v774 = vpop.f32.mrf.mxu0
        %v775 = vadd.f32 %v686, %v774
        %776 = vmatmul.bf16.gmra.mxu0 %v607
        %v777 = vpop.f32.mrf.mxu0
        %v778 = vadd.f32 %v689, %v777
        %v779 = vpop.f32.mrf.mxu0
        %v780 = vadd.f32 %v691, %v779
        %781 = vmatmul.bf16.gmra.mxu0 %v609
        %v782 = vpop.f32.mrf.mxu0
        %v783 = vadd.f32 %v694, %v782
        %v784 = vpop.f32.mrf.mxu0
        %v785 = vadd.f32 %v696, %v784
        %786 = vmatmul.bf16.gmra.mxu0 %v611
        %v787 = vpop.f32.mrf.mxu0
        %v788 = vadd.f32 %v699, %v787
        %v789 = vpop.f32.mrf.mxu0
        %v790 = vadd.f32 %v701, %v789
        %791 = vmatmul.bf16.gmra.mxu0 %v613
        %v792 = vpop.f32.mrf.mxu0
        %v793 = vadd.f32 %v704, %v792
        %v794 = vpop.f32.mrf.mxu0
        %v795 = vadd.f32 %v706, %v794
        %796 = vmatmul.bf16.gmra.mxu0 %v615
        %v797 = vpop.f32.mrf.mxu0
        %v798 = vadd.f32 %v709, %v797
        %v799 = vpop.f32.mrf.mxu0
        %v800 = vadd.f32 %v711, %v799
        %801 = vmatmul.bf16.gmra.mxu0 %v617
        %v802 = vpop.f32.mrf.mxu0
        %v803 = vadd.f32 %v714, %v802
        %v804 = vpop.f32.mrf.mxu0
        %v805 = vadd.f32 %v716, %v804
        %806 = vmatmul.bf16.gmra.mxu0 %v619
        %v807 = vpop.f32.mrf.mxu0
        %v808 = vadd.f32 %v719, %v807
        %v809 = vpop.f32.mrf.mxu0
        %v810 = vadd.f32 %v721, %v809
        %811 = vmatmul.bf16.gmra.mxu0 %v621
        %v812 = vpop.f32.mrf.mxu0
        %v813 = vadd.f32 %v724, %v812
        %v814 = vpop.f32.mrf.mxu0
        %v815 = vadd.f32 %v726, %v814
        %816 = vmatmul.bf16.gmra.mxu0 %v623
        %v817 = vpop.f32.mrf.mxu0
        %v818 = vadd.f32 %v729, %v817
        %v819 = vpop.f32.mrf.mxu0
        %v820 = vadd.f32 %v731, %v819
        %821 = vmatmul.bf16.gmra.mxu0 %v625
        %v822 = vpop.f32.mrf.mxu0
        %v823 = vadd.f32 %v734, %v822
        %v824 = vpop.f32.mrf.mxu0
        %v825 = vadd.f32 %v736, %v824
        %826 = vmatmul.bf16.gmra.mxu0 %v627
        %v827 = vpop.f32.mrf.mxu0
        %v828 = vadd.f32 %v739, %v827
        %v829 = vpop.f32.mrf.mxu0
        %v830 = vadd.f32 %v741, %v829
        %831 = vmatmul.bf16.gmra.mxu0 %v629
        %v832 = vpop.f32.mrf.mxu0
        %v833 = vadd.f32 %v744, %v832
        %v834 = vpop.f32.mrf.mxu0
        %v835 = vadd.f32 %v746, %v834
        %836 = vmatmul.bf16.gmra.mxu0 %v631
        %v837 = vpop.f32.mrf.mxu0
        %v838 = vadd.f32 %v749, %v837
        %v839 = vpop.f32.mrf.mxu0
        %v840 = vadd.f32 %v751, %v839
        %841 = vdwg.mxu0
        %v842 = vmax.f32 %v763, 0.0
        %v843 = vmax.f32 %v765, 0.0
        %v844 = vmax.f32 %v768, 0.0
        %v845 = vmax.f32 %v770, 0.0
        %v846 = vmax.f32 %v773, 0.0
        %v847 = vmax.f32 %v775, 0.0
        %v848 = vmax.f32 %v778, 0.0
        %v849 = vmax.f32 %v780, 0.0
        %v850 = vmax.f32 %v783, 0.0
        %v851 = vmax.f32 %v785, 0.0
        %v852 = vmax.f32 %v788, 0.0
        %v853 = vmax.f32 %v790, 0.0
        %v854 = vmax.f32 %v793, 0.0
        %v855 = vmax.f32 %v795, 0.0
        %v856 = vmax.f32 %v798, 0.0
        %v857 = vmax.f32 %v800, 0.0
        %v858 = vmax.f32 %v803, 0.0
        %v859 = vmax.f32 %v805, 0.0
        %v860 = vmax.f32 %v808, 0.0
        %v861 = vmax.f32 %v810, 0.0
        %v862 = vmax.f32 %v813, 0.0
        %v863 = vmax.f32 %v815, 0.0
        %v864 = vmax.f32 %v818, 0.0
        %v865 = vmax.f32 %v820, 0.0
        %v866 = vmax.f32 %v823, 0.0
        %v867 = vmax.f32 %v825, 0.0
        %v868 = vmax.f32 %v828, 0.0
        %v869 = vmax.f32 %v830, 0.0
        %v870 = vmax.f32 %v833, 0.0
        %v871 = vmax.f32 %v835, 0.0
        %v872 = vmax.f32 %v838, 0.0
        %v873 = vmax.f32 %v840, 0.0
        %v874 = vpack.c.bf16 %v843, %v842
        %v875 = vpack.c.bf16 %v845, %v844
        %v876 = vpack.c.bf16 %v847, %v846
        %v877 = vpack.c.bf16 %v849, %v848
        %v878 = vpack.c.bf16 %v851, %v850
        %v879 = vpack.c.bf16 %v853, %v852
        %v880 = vpack.c.bf16 %v855, %v854
        %v881 = vpack.c.bf16 %v857, %v856
        %v882 = vpack.c.bf16 %v859, %v858
        %v883 = vpack.c.bf16 %v861, %v860
        %v884 = vpack.c.bf16 %v863, %v862
        %v885 = vpack.c.bf16 %v865, %v864
        %v886 = vpack.c.bf16 %v867, %v866
        %v887 = vpack.c.bf16 %v869, %v868
        %v888 = vpack.c.bf16 %v871, %v870
        %v889 = vpack.c.bf16 %v873, %v872
        %v890 = vld [vmem:[%s2 + $0x40] sm:$0xf]
        %v891 = vld [vmem:[%s2 + $0x44] sm:$0xf]
        %v892 = vld [vmem:[%s2 + $0x48] sm:$0xf]
        %v893 = vld [vmem:[%s2 + $0x4c] sm:$0xf]
        %v894 = vld [vmem:[%s2 + $0x50] sm:$0xf]
        %v895 = vld [vmem:[%s2 + $0x54] sm:$0xf]
        %v896 = vld [vmem:[%s2 + $0x58] sm:$0xf]
        %v897 = vld [vmem:[%s2 + $0x5c] sm:$0xf]
        %v898 = vld [vmem:[%s2 + $0x60] sm:$0xf]
        %v899 = vld [vmem:[%s2 + $0x64] sm:$0xf]
        %v900 = vld [vmem:[%s2 + $0x68] sm:$0xf]
        %v901 = vld [vmem:[%s2 + $0x6c] sm:$0xf]
        %v902 = vld [vmem:[%s2 + $0x70] sm:$0xf]
        %v903 = vld [vmem:[%s2 + $0x74] sm:$0xf]
        %v904 = vld [vmem:[%s2 + $0x78] sm:$0xf]
        %v905 = vld [vmem:[%s2 + $0x7c] sm:$0xf]
        %v922 = vunpack.c.l.b16 %v890
        %v923 = vunpack.c.l.b16 %v891
        %v924 = vunpack.c.l.b16 %v892
        %v925 = vunpack.c.l.b16 %v893
        %v926 = vunpack.c.l.b16 %v894
        %v927 = vunpack.c.l.b16 %v895
        %v928 = vunpack.c.l.b16 %v896
        %v929 = vunpack.c.l.b16 %v897
        %v930 = vunpack.c.l.b16 %v898
        %v931 = vunpack.c.l.b16 %v899
        %v932 = vunpack.c.l.b16 %v900
        %v933 = vunpack.c.l.b16 %v901
        %v934 = vunpack.c.l.b16 %v902
        %v935 = vunpack.c.l.b16 %v903
        %v936 = vunpack.c.l.b16 %v904
        %v937 = vunpack.c.l.b16 %v905
        %v938 = vpack.c.b16 %v923, %v922
        %v939 = vpack.c.b16 %v925, %v924
        %v940 = vpack.c.b16 %v927, %v926
        %v941 = vpack.c.b16 %v929, %v928
        %v942 = vpack.c.b16 %v931, %v930
        %v943 = vpack.c.b16 %v933, %v932
        %v944 = vpack.c.b16 %v935, %v934
        %v945 = vpack.c.b16 %v937, %v936
        %954 = vmatpush.bf16.msra.mxu0 %v945
        %955 = vmatpush.bf16.msra.mxu0 %v944
        %956 = vmatpush.bf16.msra.mxu0 %v943
        %957 = vmatpush.bf16.msra.mxu0 %v942
        %958 = vmatpush.bf16.msra.mxu0 %v941
        %959 = vmatpush.bf16.msra.mxu0 %v940
        %960 = vmatpush.bf16.msra.mxu0 %v939
        %961 = vmatpush.bf16.msra.mxu0 %v938
        %962 = vmatmul.bf16.gmra.mxu0 %v874
        %v963 = vpop.f32.mrf.mxu0
        %v964 = vadd.f32 0.0, %v963
        %v965 = vpop.f32.mrf.mxu0
        %v966 = vadd.f32 0.0, %v965
        %967 = vmatmul.bf16.gmra.mxu0 %v875
        %v968 = vpop.f32.mrf.mxu0
        %v969 = vadd.f32 0.0, %v968
        %v970 = vpop.f32.mrf.mxu0
        %v971 = vadd.f32 0.0, %v970
        %972 = vmatmul.bf16.gmra.mxu0 %v876
        %v973 = vpop.f32.mrf.mxu0
        %v974 = vadd.f32 0.0, %v973
        %v975 = vpop.f32.mrf.mxu0
        %v976 = vadd.f32 0.0, %v975
        %977 = vmatmul.bf16.gmra.mxu0 %v877
        %v978 = vpop.f32.mrf.mxu0
        %v979 = vadd.f32 0.0, %v978
        %v980 = vpop.f32.mrf.mxu0
        %v981 = vadd.f32 0.0, %v980
        %982 = vmatmul.bf16.gmra.mxu0 %v878
        %v983 = vpop.f32.mrf.mxu0
        %v984 = vadd.f32 0.0, %v983
        %v985 = vpop.f32.mrf.mxu0
        %v986 = vadd.f32 0.0, %v985
        %987 = vmatmul.bf16.gmra.mxu0 %v879
        %v988 = vpop.f32.mrf.mxu0
        %v989 = vadd.f32 0.0, %v988
        %v990 = vpop.f32.mrf.mxu0
        %v991 = vadd.f32 0.0, %v990
        %992 = vmatmul.bf16.gmra.mxu0 %v880
        %v993 = vpop.f32.mrf.mxu0
        %v994 = vadd.f32 0.0, %v993
        %v995 = vpop.f32.mrf.mxu0
        %v996 = vadd.f32 0.0, %v995
        %997 = vmatmul.bf16.gmra.mxu0 %v881
        %v998 = vpop.f32.mrf.mxu0
        %v999 = vadd.f32 0.0, %v998
        %v1000 = vpop.f32.mrf.mxu0
        %v1001 = vadd.f32 0.0, %v1000
        %1002 = vmatmul.bf16.gmra.mxu0 %v882
        %v1003 = vpop.f32.mrf.mxu0
        %v1004 = vadd.f32 0.0, %v1003
        %v1005 = vpop.f32.mrf.mxu0
        %v1006 = vadd.f32 0.0, %v1005
        %1007 = vmatmul.bf16.gmra.mxu0 %v883
        %v1008 = vpop.f32.mrf.mxu0
        %v1009 = vadd.f32 0.0, %v1008
        %v1010 = vpop.f32.mrf.mxu0
        %v1011 = vadd.f32 0.0, %v1010
        %1012 = vmatmul.bf16.gmra.mxu0 %v884
        %v1013 = vpop.f32.mrf.mxu0
        %v1014 = vadd.f32 0.0, %v1013
        %v1015 = vpop.f32.mrf.mxu0
        %v1016 = vadd.f32 0.0, %v1015
        %1017 = vmatmul.bf16.gmra.mxu0 %v885
        %v1018 = vpop.f32.mrf.mxu0
        %v1019 = vadd.f32 0.0, %v1018
        %v1020 = vpop.f32.mrf.mxu0
        %v1021 = vadd.f32 0.0, %v1020
        %1022 = vmatmul.bf16.gmra.mxu0 %v886
        %v1023 = vpop.f32.mrf.mxu0
        %v1024 = vadd.f32 0.0, %v1023
        %v1025 = vpop.f32.mrf.mxu0
        %v1026 = vadd.f32 0.0, %v1025
        %1027 = vmatmul.bf16.gmra.mxu0 %v887
        %v1028 = vpop.f32.mrf.mxu0
        %v1029 = vadd.f32 0.0, %v1028
        %v1030 = vpop.f32.mrf.mxu0
        %v1031 = vadd.f32 0.0, %v1030
        %1032 = vmatmul.bf16.gmra.mxu0 %v888
        %v1033 = vpop.f32.mrf.mxu0
        %v1034 = vadd.f32 0.0, %v1033
        %v1035 = vpop.f32.mrf.mxu0
        %v1036 = vadd.f32 0.0, %v1035
        %1037 = vmatmul.bf16.gmra.mxu0 %v889
        %v1038 = vpop.f32.mrf.mxu0
        %v1039 = vadd.f32 0.0, %v1038
        %v1040 = vpop.f32.mrf.mxu0
        %v1041 = vadd.f32 0.0, %v1040
        %1042 = vdwg.mxu0
        %v1043 = vpack.c.bf16 %v966, %v964
        %v1044 = vpack.c.bf16 %v971, %v969
        %v1045 = vpack.c.bf16 %v976, %v974
        %v1046 = vpack.c.bf16 %v981, %v979
        %v1047 = vpack.c.bf16 %v986, %v984
        %v1048 = vpack.c.bf16 %v991, %v989
        %v1049 = vpack.c.bf16 %v996, %v994
        %v1050 = vpack.c.bf16 %v1001, %v999
        %v1051 = vpack.c.bf16 %v1006, %v1004
        %v1052 = vpack.c.bf16 %v1011, %v1009
        %v1053 = vpack.c.bf16 %v1016, %v1014
        %v1054 = vpack.c.bf16 %v1021, %v1019
        %v1055 = vpack.c.bf16 %v1026, %v1024
        %v1056 = vpack.c.bf16 %v1031, %v1029
        %v1057 = vpack.c.bf16 %v1036, %v1034
        %v1058 = vpack.c.bf16 %v1041, %v1039
        %v1059 = vld [vmem:[%s2 + $0xc4] sm:$0x1]
        %v1060 = vunpack.c.l.bf16 %v1059
        %v1061 = vperm.slane %v1060, 0
        %1062 = vmatpush.bf16.msra.mxu0 %v1050
        %1063 = vmatpush.bf16.msra.mxu0 %v1049
        %1064 = vmatpush.bf16.msra.mxu0 %v1048
        %1065 = vmatpush.bf16.msra.mxu0 %v1047
        %1066 = vmatpush.bf16.msra.mxu0 %v1046
        %1067 = vmatpush.bf16.msra.mxu0 %v1045
        %1068 = vmatpush.bf16.msra.mxu0 %v1044
        %1069 = vmatpush.bf16.msra.mxu0 %v1043
        %1070 = vmatmul.bf16.gmra.mxu0 %v600
        %v1071 = vpop.f32.mrf.mxu0
        %v1072 = vadd.f32 %v1061, %v1071
        %v1073 = vpop.f32.mrf.mxu0
        %v1074 = vadd.f32 %v1061, %v1073
        %1075 = vmatmul.bf16.gmra.mxu0 %v602
        %v1076 = vpop.f32.mrf.mxu0
        %v1077 = vadd.f32 %v1061, %v1076
        %v1078 = vpop.f32.mrf.mxu0
        %v1079 = vadd.f32 %v1061, %v1078
        %1080 = vmatmul.bf16.gmra.mxu0 %v604
        %v1081 = vpop.f32.mrf.mxu0
        %v1082 = vadd.f32 %v1061, %v1081
        %v1083 = vpop.f32.mrf.mxu0
        %v1084 = vadd.f32 %v1061, %v1083
        %1085 = vmatmul.bf16.gmra.mxu0 %v606
        %v1086 = vpop.f32.mrf.mxu0
        %v1087 = vadd.f32 %v1061, %v1086
        %v1088 = vpop.f32.mrf.mxu0
        %v1089 = vadd.f32 %v1061, %v1088
        %1090 = vmatmul.bf16.gmra.mxu0 %v608
        %v1091 = vpop.f32.mrf.mxu0
        %v1092 = vadd.f32 %v1061, %v1091
        %v1093 = vpop.f32.mrf.mxu0
        %v1094 = vadd.f32 %v1061, %v1093
        %1095 = vmatmul.bf16.gmra.mxu0 %v610
        %v1096 = vpop.f32.mrf.mxu0
        %v1097 = vadd.f32 %v1061, %v1096
        %v1098 = vpop.f32.mrf.mxu0
        %v1099 = vadd.f32 %v1061, %v1098
        %1100 = vmatmul.bf16.gmra.mxu0 %v612
        %v1101 = vpop.f32.mrf.mxu0
        %v1102 = vadd.f32 %v1061, %v1101
        %v1103 = vpop.f32.mrf.mxu0
        %v1104 = vadd.f32 %v1061, %v1103
        %1105 = vmatmul.bf16.gmra.mxu0 %v614
        %v1106 = vpop.f32.mrf.mxu0
        %v1107 = vadd.f32 %v1061, %v1106
        %v1108 = vpop.f32.mrf.mxu0
        %v1109 = vadd.f32 %v1061, %v1108
        %1110 = vmatmul.bf16.gmra.mxu0 %v616
        %v1111 = vpop.f32.mrf.mxu0
        %v1112 = vadd.f32 %v1061, %v1111
        %v1113 = vpop.f32.mrf.mxu0
        %v1114 = vadd.f32 %v1061, %v1113
        %1115 = vmatmul.bf16.gmra.mxu0 %v618
        %v1116 = vpop.f32.mrf.mxu0
        %v1117 = vadd.f32 %v1061, %v1116
        %v1118 = vpop.f32.mrf.mxu0
        %v1119 = vadd.f32 %v1061, %v1118
        %1120 = vmatmul.bf16.gmra.mxu0 %v620
        %v1121 = vpop.f32.mrf.mxu0
        %v1122 = vadd.f32 %v1061, %v1121
        %v1123 = vpop.f32.mrf.mxu0
        %v1124 = vadd.f32 %v1061, %v1123
        %1125 = vmatmul.bf16.gmra.mxu0 %v622
        %v1126 = vpop.f32.mrf.mxu0
        %v1127 = vadd.f32 %v1061, %v1126
        %v1128 = vpop.f32.mrf.mxu0
        %v1129 = vadd.f32 %v1061, %v1128
        %1130 = vmatmul.bf16.gmra.mxu0 %v624
        %v1131 = vpop.f32.mrf.mxu0
        %v1132 = vadd.f32 %v1061, %v1131
        %v1133 = vpop.f32.mrf.mxu0
        %v1134 = vadd.f32 %v1061, %v1133
        %1135 = vmatmul.bf16.gmra.mxu0 %v626
        %v1136 = vpop.f32.mrf.mxu0
        %v1137 = vadd.f32 %v1061, %v1136
        %v1138 = vpop.f32.mrf.mxu0
        %v1139 = vadd.f32 %v1061, %v1138
        %1140 = vmatmul.bf16.gmra.mxu0 %v628
        %v1141 = vpop.f32.mrf.mxu0
        %v1142 = vadd.f32 %v1061, %v1141
        %v1143 = vpop.f32.mrf.mxu0
        %v1144 = vadd.f32 %v1061, %v1143
        %1145 = vmatmul.bf16.gmra.mxu0 %v630
        %v1146 = vpop.f32.mrf.mxu0
        %v1147 = vadd.f32 %v1061, %v1146
        %v1148 = vpop.f32.mrf.mxu0
        %v1149 = vadd.f32 %v1061, %v1148
        %1150 = vdwg.mxu0
        %1151 = vmatpush.bf16.msra.mxu0 %v1058
        %1152 = vmatpush.bf16.msra.mxu0 %v1057
        %1153 = vmatpush.bf16.msra.mxu0 %v1056
        %1154 = vmatpush.bf16.msra.mxu0 %v1055
        %1155 = vmatpush.bf16.msra.mxu0 %v1054
        %1156 = vmatpush.bf16.msra.mxu0 %v1053
        %1157 = vmatpush.bf16.msra.mxu0 %v1052
        %1158 = vmatpush.bf16.msra.mxu0 %v1051
        %1159 = vmatmul.bf16.gmra.mxu0 %v601
        %v1160 = vpop.f32.mrf.mxu0
        %v1161 = vadd.f32 %v1072, %v1160
        %v1162 = vpop.f32.mrf.mxu0
        %v1163 = vadd.f32 %v1074, %v1162
        %1164 = vmatmul.bf16.gmra.mxu0 %v603
        %v1165 = vpop.f32.mrf.mxu0
        %v1166 = vadd.f32 %v1077, %v1165
        %v1167 = vpop.f32.mrf.mxu0
        %v1168 = vadd.f32 %v1079, %v1167
        %1169 = vmatmul.bf16.gmra.mxu0 %v605
        %v1170 = vpop.f32.mrf.mxu0
        %v1171 = vadd.f32 %v1082, %v1170
        %v1172 = vpop.f32.mrf.mxu0
        %v1173 = vadd.f32 %v1084, %v1172
        %1174 = vmatmul.bf16.gmra.mxu0 %v607
        %v1175 = vpop.f32.mrf.mxu0
        %v1176 = vadd.f32 %v1087, %v1175
        %v1177 = vpop.f32.mrf.mxu0
        %v1178 = vadd.f32 %v1089, %v1177
        %1179 = vmatmul.bf16.gmra.mxu0 %v609
        %v1180 = vpop.f32.mrf.mxu0
        %v1181 = vadd.f32 %v1092, %v1180
        %v1182 = vpop.f32.mrf.mxu0
        %v1183 = vadd.f32 %v1094, %v1182
        %1184 = vmatmul.bf16.gmra.mxu0 %v611
        %v1185 = vpop.f32.mrf.mxu0
        %v1186 = vadd.f32 %v1097, %v1185
        %v1187 = vpop.f32.mrf.mxu0
        %v1188 = vadd.f32 %v1099, %v1187
        %1189 = vmatmul.bf16.gmra.mxu0 %v613
        %v1190 = vpop.f32.mrf.mxu0
        %v1191 = vadd.f32 %v1102, %v1190
        %v1192 = vpop.f32.mrf.mxu0
        %v1193 = vadd.f32 %v1104, %v1192
        %1194 = vmatmul.bf16.gmra.mxu0 %v615
        %v1195 = vpop.f32.mrf.mxu0
        %v1196 = vadd.f32 %v1107, %v1195
        %v1197 = vpop.f32.mrf.mxu0
        %v1198 = vadd.f32 %v1109, %v1197
        %1199 = vmatmul.bf16.gmra.mxu0 %v617
        %v1200 = vpop.f32.mrf.mxu0
        %v1201 = vadd.f32 %v1112, %v1200
        %v1202 = vpop.f32.mrf.mxu0
        %v1203 = vadd.f32 %v1114, %v1202
        %1204 = vmatmul.bf16.gmra.mxu0 %v619
        %v1205 = vpop.f32.mrf.mxu0
        %v1206 = vadd.f32 %v1117, %v1205
        %v1207 = vpop.f32.mrf.mxu0
        %v1208 = vadd.f32 %v1119, %v1207
        %1209 = vmatmul.bf16.gmra.mxu0 %v621
        %v1210 = vpop.f32.mrf.mxu0
        %v1211 = vadd.f32 %v1122, %v1210
        %v1212 = vpop.f32.mrf.mxu0
        %v1213 = vadd.f32 %v1124, %v1212
        %1214 = vmatmul.bf16.gmra.mxu0 %v623
        %v1215 = vpop.f32.mrf.mxu0
        %v1216 = vadd.f32 %v1127, %v1215
        %v1217 = vpop.f32.mrf.mxu0
        %v1218 = vadd.f32 %v1129, %v1217
        %1219 = vmatmul.bf16.gmra.mxu0 %v625
        %v1220 = vpop.f32.mrf.mxu0
        %v1221 = vadd.f32 %v1132, %v1220
        %v1222 = vpop.f32.mrf.mxu0
        %v1223 = vadd.f32 %v1134, %v1222
        %1224 = vmatmul.bf16.gmra.mxu0 %v627
        %v1225 = vpop.f32.mrf.mxu0
        %v1226 = vadd.f32 %v1137, %v1225
        %v1227 = vpop.f32.mrf.mxu0
        %v1228 = vadd.f32 %v1139, %v1227
        %1229 = vmatmul.bf16.gmra.mxu0 %v629
        %v1230 = vpop.f32.mrf.mxu0
        %v1231 = vadd.f32 %v1142, %v1230
        %v1232 = vpop.f32.mrf.mxu0
        %v1233 = vadd.f32 %v1144, %v1232
        %1234 = vmatmul.bf16.gmra.mxu0 %v631
        %v1235 = vpop.f32.mrf.mxu0
        %v1236 = vadd.f32 %v1147, %v1235
        %v1237 = vpop.f32.mrf.mxu0
        %v1238 = vadd.f32 %v1149, %v1237
        %1239 = vdwg.mxu0
        %v1240 = vmax.f32 %v1161, 0.0
        %v1241 = vmax.f32 %v1163, 0.0
        %v1242 = vmax.f32 %v1166, 0.0
        %v1243 = vmax.f32 %v1168, 0.0
        %v1244 = vmax.f32 %v1171, 0.0
        %v1245 = vmax.f32 %v1173, 0.0
        %v1246 = vmax.f32 %v1176, 0.0
        %v1247 = vmax.f32 %v1178, 0.0
        %v1248 = vmax.f32 %v1181, 0.0
        %v1249 = vmax.f32 %v1183, 0.0
        %v1250 = vmax.f32 %v1186, 0.0
        %v1251 = vmax.f32 %v1188, 0.0
        %v1252 = vmax.f32 %v1191, 0.0
        %v1253 = vmax.f32 %v1193, 0.0
        %v1254 = vmax.f32 %v1196, 0.0
        %v1255 = vmax.f32 %v1198, 0.0
        %v1256 = vmax.f32 %v1201, 0.0
        %v1257 = vmax.f32 %v1203, 0.0
        %v1258 = vmax.f32 %v1206, 0.0
        %v1259 = vmax.f32 %v1208, 0.0
        %v1260 = vmax.f32 %v1211, 0.0
        %v1261 = vmax.f32 %v1213, 0.0
        %v1262 = vmax.f32 %v1216, 0.0
        %v1263 = vmax.f32 %v1218, 0.0
        %v1264 = vmax.f32 %v1221, 0.0
        %v1265 = vmax.f32 %v1223, 0.0
        %v1266 = vmax.f32 %v1226, 0.0
        %v1267 = vmax.f32 %v1228, 0.0
        %v1268 = vmax.f32 %v1231, 0.0
        %v1269 = vmax.f32 %v1233, 0.0
        %v1270 = vmax.f32 %v1236, 0.0
        %v1271 = vmax.f32 %v1238, 0.0
        %v1272 = vpack.c.bf16 %v1241, %v1240
        %v1273 = vpack.c.bf16 %v1243, %v1242
        %v1274 = vpack.c.bf16 %v1245, %v1244
        %v1275 = vpack.c.bf16 %v1247, %v1246
        %v1276 = vpack.c.bf16 %v1249, %v1248
        %v1277 = vpack.c.bf16 %v1251, %v1250
        %v1278 = vpack.c.bf16 %v1253, %v1252
        %v1279 = vpack.c.bf16 %v1255, %v1254
        %v1280 = vpack.c.bf16 %v1257, %v1256
        %v1281 = vpack.c.bf16 %v1259, %v1258
        %v1282 = vpack.c.bf16 %v1261, %v1260
        %v1283 = vpack.c.bf16 %v1263, %v1262
        %v1284 = vpack.c.bf16 %v1265, %v1264
        %v1285 = vpack.c.bf16 %v1267, %v1266
        %v1286 = vpack.c.bf16 %v1269, %v1268
        %v1287 = vpack.c.bf16 %v1271, %v1270
        %v1288 = vld [vmem:[%s2 + $0x80] sm:$0xf]
        %v1289 = vld [vmem:[%s2 + $0x84] sm:$0xf]
        %v1290 = vld [vmem:[%s2 + $0x88] sm:$0xf]
        %v1291 = vld [vmem:[%s2 + $0x8c] sm:$0xf]
        %v1292 = vld [vmem:[%s2 + $0x90] sm:$0xf]
        %v1293 = vld [vmem:[%s2 + $0x94] sm:$0xf]
        %v1294 = vld [vmem:[%s2 + $0x98] sm:$0xf]
        %v1295 = vld [vmem:[%s2 + $0x9c] sm:$0xf]
        %v1296 = vld [vmem:[%s2 + $0xa0] sm:$0xf]
        %v1297 = vld [vmem:[%s2 + $0xa4] sm:$0xf]
        %v1298 = vld [vmem:[%s2 + $0xa8] sm:$0xf]
        %v1299 = vld [vmem:[%s2 + $0xac] sm:$0xf]
        %v1300 = vld [vmem:[%s2 + $0xb0] sm:$0xf]
        %v1301 = vld [vmem:[%s2 + $0xb4] sm:$0xf]
        %v1302 = vld [vmem:[%s2 + $0xb8] sm:$0xf]
        %v1303 = vld [vmem:[%s2 + $0xbc] sm:$0xf]
        %v1320 = vunpack.c.l.b16 %v1288
        %v1321 = vunpack.c.l.b16 %v1289
        %v1322 = vunpack.c.l.b16 %v1290
        %v1323 = vunpack.c.l.b16 %v1291
        %v1324 = vunpack.c.l.b16 %v1292
        %v1325 = vunpack.c.l.b16 %v1293
        %v1326 = vunpack.c.l.b16 %v1294
        %v1327 = vunpack.c.l.b16 %v1295
        %v1328 = vunpack.c.l.b16 %v1296
        %v1329 = vunpack.c.l.b16 %v1297
        %v1330 = vunpack.c.l.b16 %v1298
        %v1331 = vunpack.c.l.b16 %v1299
        %v1332 = vunpack.c.l.b16 %v1300
        %v1333 = vunpack.c.l.b16 %v1301
        %v1334 = vunpack.c.l.b16 %v1302
        %v1335 = vunpack.c.l.b16 %v1303
        %v1336 = vpack.c.b16 %v1321, %v1320
        %v1337 = vpack.c.b16 %v1323, %v1322
        %v1338 = vpack.c.b16 %v1325, %v1324
        %v1339 = vpack.c.b16 %v1327, %v1326
        %v1340 = vpack.c.b16 %v1329, %v1328
        %v1341 = vpack.c.b16 %v1331, %v1330
        %v1342 = vpack.c.b16 %v1333, %v1332
        %v1343 = vpack.c.b16 %v1335, %v1334
        %1352 = vmatpush.bf16.msra.mxu0 %v1343
        %1353 = vmatpush.bf16.msra.mxu0 %v1342
        %1354 = vmatpush.bf16.msra.mxu0 %v1341
        %1355 = vmatpush.bf16.msra.mxu0 %v1340
        %1356 = vmatpush.bf16.msra.mxu0 %v1339
        %1357 = vmatpush.bf16.msra.mxu0 %v1338
        %1358 = vmatpush.bf16.msra.mxu0 %v1337
        %1359 = vmatpush.bf16.msra.mxu0 %v1336
        %1360 = vmatmul.bf16.gmra.mxu0 %v1272
        %v1361 = vpop.f32.mrf.mxu0
        %v1362 = vadd.f32 0.0, %v1361
        %v1363 = vpop.f32.mrf.mxu0
        %v1364 = vadd.f32 0.0, %v1363
        %1365 = vmatmul.bf16.gmra.mxu0 %v1273
        %v1366 = vpop.f32.mrf.mxu0
        %v1367 = vadd.f32 0.0, %v1366
        %v1368 = vpop.f32.mrf.mxu0
        %v1369 = vadd.f32 0.0, %v1368
        %1370 = vmatmul.bf16.gmra.mxu0 %v1274
        %v1371 = vpop.f32.mrf.mxu0
        %v1372 = vadd.f32 0.0, %v1371
        %v1373 = vpop.f32.mrf.mxu0
        %v1374 = vadd.f32 0.0, %v1373
        %1375 = vmatmul.bf16.gmra.mxu0 %v1275
        %v1376 = vpop.f32.mrf.mxu0
        %v1377 = vadd.f32 0.0, %v1376
        %v1378 = vpop.f32.mrf.mxu0
        %v1379 = vadd.f32 0.0, %v1378
        %1380 = vmatmul.bf16.gmra.mxu0 %v1276
        %v1381 = vpop.f32.mrf.mxu0
        %v1382 = vadd.f32 0.0, %v1381
        %v1383 = vpop.f32.mrf.mxu0
        %v1384 = vadd.f32 0.0, %v1383
        %1385 = vmatmul.bf16.gmra.mxu0 %v1277
        %v1386 = vpop.f32.mrf.mxu0
        %v1387 = vadd.f32 0.0, %v1386
        %v1388 = vpop.f32.mrf.mxu0
        %v1389 = vadd.f32 0.0, %v1388
        %1390 = vmatmul.bf16.gmra.mxu0 %v1278
        %v1391 = vpop.f32.mrf.mxu0
        %v1392 = vadd.f32 0.0, %v1391
        %v1393 = vpop.f32.mrf.mxu0
        %v1394 = vadd.f32 0.0, %v1393
        %1395 = vmatmul.bf16.gmra.mxu0 %v1279
        %v1396 = vpop.f32.mrf.mxu0
        %v1397 = vadd.f32 0.0, %v1396
        %v1398 = vpop.f32.mrf.mxu0
        %v1399 = vadd.f32 0.0, %v1398
        %1400 = vmatmul.bf16.gmra.mxu0 %v1280
        %v1401 = vpop.f32.mrf.mxu0
        %v1402 = vadd.f32 0.0, %v1401
        %v1403 = vpop.f32.mrf.mxu0
        %v1404 = vadd.f32 0.0, %v1403
        %1405 = vmatmul.bf16.gmra.mxu0 %v1281
        %v1406 = vpop.f32.mrf.mxu0
        %v1407 = vadd.f32 0.0, %v1406
        %v1408 = vpop.f32.mrf.mxu0
        %v1409 = vadd.f32 0.0, %v1408
        %1410 = vmatmul.bf16.gmra.mxu0 %v1282
        %v1411 = vpop.f32.mrf.mxu0
        %v1412 = vadd.f32 0.0, %v1411
        %v1413 = vpop.f32.mrf.mxu0
        %v1414 = vadd.f32 0.0, %v1413
        %1415 = vmatmul.bf16.gmra.mxu0 %v1283
        %v1416 = vpop.f32.mrf.mxu0
        %v1417 = vadd.f32 0.0, %v1416
        %v1418 = vpop.f32.mrf.mxu0
        %v1419 = vadd.f32 0.0, %v1418
        %1420 = vmatmul.bf16.gmra.mxu0 %v1284
        %v1421 = vpop.f32.mrf.mxu0
        %v1422 = vadd.f32 0.0, %v1421
        %v1423 = vpop.f32.mrf.mxu0
        %v1424 = vadd.f32 0.0, %v1423
        %1425 = vmatmul.bf16.gmra.mxu0 %v1285
        %v1426 = vpop.f32.mrf.mxu0
        %v1427 = vadd.f32 0.0, %v1426
        %v1428 = vpop.f32.mrf.mxu0
        %v1429 = vadd.f32 0.0, %v1428
        %1430 = vmatmul.bf16.gmra.mxu0 %v1286
        %v1431 = vpop.f32.mrf.mxu0
        %v1432 = vadd.f32 0.0, %v1431
        %v1433 = vpop.f32.mrf.mxu0
        %v1434 = vadd.f32 0.0, %v1433
        %1435 = vmatmul.bf16.gmra.mxu0 %v1287
        %v1436 = vpop.f32.mrf.mxu0
        %v1437 = vadd.f32 0.0, %v1436
        %v1438 = vpop.f32.mrf.mxu0
        %v1439 = vadd.f32 0.0, %v1438
        %1440 = vdwg.mxu0
        %v1441 = vpack.c.bf16 %v1364, %v1362
        %v1442 = vpack.c.bf16 %v1369, %v1367
        %v1443 = vpack.c.bf16 %v1374, %v1372
        %v1444 = vpack.c.bf16 %v1379, %v1377
        %v1445 = vpack.c.bf16 %v1384, %v1382
        %v1446 = vpack.c.bf16 %v1389, %v1387
        %v1447 = vpack.c.bf16 %v1394, %v1392
        %v1448 = vpack.c.bf16 %v1399, %v1397
        %v1449 = vpack.c.bf16 %v1404, %v1402
        %v1450 = vpack.c.bf16 %v1409, %v1407
        %v1451 = vpack.c.bf16 %v1414, %v1412
        %v1452 = vpack.c.bf16 %v1419, %v1417
        %v1453 = vpack.c.bf16 %v1424, %v1422
        %v1454 = vpack.c.bf16 %v1429, %v1427
        %v1455 = vpack.c.bf16 %v1434, %v1432
        %v1456 = vpack.c.bf16 %v1439, %v1437
        %v1457 = vld [vmem:[%s2 + $0xc8] sm:$0x1]
        %v1458 = vunpack.c.l.bf16 %v1457
        %v1459 = vperm.slane %v1458, 0
        %1460 = vmatpush.bf16.msra.mxu0 %v1448
        %1461 = vmatpush.bf16.msra.mxu0 %v1447
        %1462 = vmatpush.bf16.msra.mxu0 %v1446
        %1463 = vmatpush.bf16.msra.mxu0 %v1445
        %1464 = vmatpush.bf16.msra.mxu0 %v1444
        %1465 = vmatpush.bf16.msra.mxu0 %v1443
        %1466 = vmatpush.bf16.msra.mxu0 %v1442
        %1467 = vmatpush.bf16.msra.mxu0 %v1441
        %1468 = vmatmul.bf16.gmra.mxu0 %v600
        %v1469 = vpop.f32.mrf.mxu0
        %v1470 = vadd.f32 %v1459, %v1469
        %v1471 = vpop.f32.mrf.mxu0
        %v1472 = vadd.f32 %v1459, %v1471
        %1473 = vmatmul.bf16.gmra.mxu0 %v602
        %v1474 = vpop.f32.mrf.mxu0
        %v1475 = vadd.f32 %v1459, %v1474
        %v1476 = vpop.f32.mrf.mxu0
        %v1477 = vadd.f32 %v1459, %v1476
        %1478 = vmatmul.bf16.gmra.mxu0 %v604
        %v1479 = vpop.f32.mrf.mxu0
        %v1480 = vadd.f32 %v1459, %v1479
        %v1481 = vpop.f32.mrf.mxu0
        %v1482 = vadd.f32 %v1459, %v1481
        %1483 = vmatmul.bf16.gmra.mxu0 %v606
        %v1484 = vpop.f32.mrf.mxu0
        %v1485 = vadd.f32 %v1459, %v1484
        %v1486 = vpop.f32.mrf.mxu0
        %v1487 = vadd.f32 %v1459, %v1486
        %1488 = vmatmul.bf16.gmra.mxu0 %v608
        %v1489 = vpop.f32.mrf.mxu0
        %v1490 = vadd.f32 %v1459, %v1489
        %v1491 = vpop.f32.mrf.mxu0
        %v1492 = vadd.f32 %v1459, %v1491
        %1493 = vmatmul.bf16.gmra.mxu0 %v610
        %v1494 = vpop.f32.mrf.mxu0
        %v1495 = vadd.f32 %v1459, %v1494
        %v1496 = vpop.f32.mrf.mxu0
        %v1497 = vadd.f32 %v1459, %v1496
        %1498 = vmatmul.bf16.gmra.mxu0 %v612
        %v1499 = vpop.f32.mrf.mxu0
        %v1500 = vadd.f32 %v1459, %v1499
        %v1501 = vpop.f32.mrf.mxu0
        %v1502 = vadd.f32 %v1459, %v1501
        %1503 = vmatmul.bf16.gmra.mxu0 %v614
        %v1504 = vpop.f32.mrf.mxu0
        %v1505 = vadd.f32 %v1459, %v1504
        %v1506 = vpop.f32.mrf.mxu0
        %v1507 = vadd.f32 %v1459, %v1506
        %1508 = vmatmul.bf16.gmra.mxu0 %v616
        %v1509 = vpop.f32.mrf.mxu0
        %v1510 = vadd.f32 %v1459, %v1509
        %v1511 = vpop.f32.mrf.mxu0
        %v1512 = vadd.f32 %v1459, %v1511
        %1513 = vmatmul.bf16.gmra.mxu0 %v618
        %v1514 = vpop.f32.mrf.mxu0
        %v1515 = vadd.f32 %v1459, %v1514
        %v1516 = vpop.f32.mrf.mxu0
        %v1517 = vadd.f32 %v1459, %v1516
        %1518 = vmatmul.bf16.gmra.mxu0 %v620
        %v1519 = vpop.f32.mrf.mxu0
        %v1520 = vadd.f32 %v1459, %v1519
        %v1521 = vpop.f32.mrf.mxu0
        %v1522 = vadd.f32 %v1459, %v1521
        %1523 = vmatmul.bf16.gmra.mxu0 %v622
        %v1524 = vpop.f32.mrf.mxu0
        %v1525 = vadd.f32 %v1459, %v1524
        %v1526 = vpop.f32.mrf.mxu0
        %v1527 = vadd.f32 %v1459, %v1526
        %1528 = vmatmul.bf16.gmra.mxu0 %v624
        %v1529 = vpop.f32.mrf.mxu0
        %v1530 = vadd.f32 %v1459, %v1529
        %v1531 = vpop.f32.mrf.mxu0
        %v1532 = vadd.f32 %v1459, %v1531
        %1533 = vmatmul.bf16.gmra.mxu0 %v626
        %v1534 = vpop.f32.mrf.mxu0
        %v1535 = vadd.f32 %v1459, %v1534
        %v1536 = vpop.f32.mrf.mxu0
        %v1537 = vadd.f32 %v1459, %v1536
        %1538 = vmatmul.bf16.gmra.mxu0 %v628
        %v1539 = vpop.f32.mrf.mxu0
        %v1540 = vadd.f32 %v1459, %v1539
        %v1541 = vpop.f32.mrf.mxu0
        %v1542 = vadd.f32 %v1459, %v1541
        %1543 = vmatmul.bf16.gmra.mxu0 %v630
        %v1544 = vpop.f32.mrf.mxu0
        %v1545 = vadd.f32 %v1459, %v1544
        %v1546 = vpop.f32.mrf.mxu0
        %v1547 = vadd.f32 %v1459, %v1546
        %1548 = vdwg.mxu0
        %1549 = vmatpush.bf16.msra.mxu0 %v1456
        %1550 = vmatpush.bf16.msra.mxu0 %v1455
        %1551 = vmatpush.bf16.msra.mxu0 %v1454
        %1552 = vmatpush.bf16.msra.mxu0 %v1453
        %1553 = vmatpush.bf16.msra.mxu0 %v1452
        %1554 = vmatpush.bf16.msra.mxu0 %v1451
        %1555 = vmatpush.bf16.msra.mxu0 %v1450
        %1556 = vmatpush.bf16.msra.mxu0 %v1449
        %1557 = vmatmul.bf16.gmra.mxu0 %v601
        %v1558 = vpop.f32.mrf.mxu0
        %v1559 = vadd.f32 %v1470, %v1558
        %v1560 = vpop.f32.mrf.mxu0
        %v1561 = vadd.f32 %v1472, %v1560
        %1562 = vmatmul.bf16.gmra.mxu0 %v603
        %v1563 = vpop.f32.mrf.mxu0
        %v1564 = vadd.f32 %v1475, %v1563
        %v1565 = vpop.f32.mrf.mxu0
        %v1566 = vadd.f32 %v1477, %v1565
        %1567 = vmatmul.bf16.gmra.mxu0 %v605
        %v1568 = vpop.f32.mrf.mxu0
        %v1569 = vadd.f32 %v1480, %v1568
        %v1570 = vpop.f32.mrf.mxu0
        %v1571 = vadd.f32 %v1482, %v1570
        %1572 = vmatmul.bf16.gmra.mxu0 %v607
        %v1573 = vpop.f32.mrf.mxu0
        %v1574 = vadd.f32 %v1485, %v1573
        %v1575 = vpop.f32.mrf.mxu0
        %v1576 = vadd.f32 %v1487, %v1575
        %1577 = vmatmul.bf16.gmra.mxu0 %v609
        %v1578 = vpop.f32.mrf.mxu0
        %v1579 = vadd.f32 %v1490, %v1578
        %v1580 = vpop.f32.mrf.mxu0
        %v1581 = vadd.f32 %v1492, %v1580
        %1582 = vmatmul.bf16.gmra.mxu0 %v611
        %v1583 = vpop.f32.mrf.mxu0
        %v1584 = vadd.f32 %v1495, %v1583
        %v1585 = vpop.f32.mrf.mxu0
        %v1586 = vadd.f32 %v1497, %v1585
        %1587 = vmatmul.bf16.gmra.mxu0 %v613
        %v1588 = vpop.f32.mrf.mxu0
        %v1589 = vadd.f32 %v1500, %v1588
        %v1590 = vpop.f32.mrf.mxu0
        %v1591 = vadd.f32 %v1502, %v1590
        %1592 = vmatmul.bf16.gmra.mxu0 %v615
        %v1593 = vpop.f32.mrf.mxu0
        %v1594 = vadd.f32 %v1505, %v1593
        %v1595 = vpop.f32.mrf.mxu0
        %v1596 = vadd.f32 %v1507, %v1595
        %1597 = vmatmul.bf16.gmra.mxu0 %v617
        %v1598 = vpop.f32.mrf.mxu0
        %v1599 = vadd.f32 %v1510, %v1598
        %v1600 = vpop.f32.mrf.mxu0
        %v1601 = vadd.f32 %v1512, %v1600
        %1602 = vmatmul.bf16.gmra.mxu0 %v619
        %v1603 = vpop.f32.mrf.mxu0
        %v1604 = vadd.f32 %v1515, %v1603
        %v1605 = vpop.f32.mrf.mxu0
        %v1606 = vadd.f32 %v1517, %v1605
        %1607 = vmatmul.bf16.gmra.mxu0 %v621
        %v1608 = vpop.f32.mrf.mxu0
        %v1609 = vadd.f32 %v1520, %v1608
        %v1610 = vpop.f32.mrf.mxu0
        %v1611 = vadd.f32 %v1522, %v1610
        %1612 = vmatmul.bf16.gmra.mxu0 %v623
        %v1613 = vpop.f32.mrf.mxu0
        %v1614 = vadd.f32 %v1525, %v1613
        %v1615 = vpop.f32.mrf.mxu0
        %v1616 = vadd.f32 %v1527, %v1615
        %1617 = vmatmul.bf16.gmra.mxu0 %v625
        %v1618 = vpop.f32.mrf.mxu0
        %v1619 = vadd.f32 %v1530, %v1618
        %v1620 = vpop.f32.mrf.mxu0
        %v1621 = vadd.f32 %v1532, %v1620
        %1622 = vmatmul.bf16.gmra.mxu0 %v627
        %v1623 = vpop.f32.mrf.mxu0
        %v1624 = vadd.f32 %v1535, %v1623
        %v1625 = vpop.f32.mrf.mxu0
        %v1626 = vadd.f32 %v1537, %v1625
        %1627 = vmatmul.bf16.gmra.mxu0 %v629
        %v1628 = vpop.f32.mrf.mxu0
        %v1629 = vadd.f32 %v1540, %v1628
        %v1630 = vpop.f32.mrf.mxu0
        %v1631 = vadd.f32 %v1542, %v1630
        %1632 = vmatmul.bf16.gmra.mxu0 %v631
        %v1633 = vpop.f32.mrf.mxu0
        %v1634 = vadd.f32 %v1545, %v1633
        %v1635 = vpop.f32.mrf.mxu0
        %v1636 = vadd.f32 %v1547, %v1635
        %1637 = vdwg.mxu0
        %v1638 = vmax.f32 %v1559, 0.0
        %v1639 = vmax.f32 %v1561, 0.0
        %v1640 = vmax.f32 %v1564, 0.0
        %v1641 = vmax.f32 %v1566, 0.0
        %v1642 = vmax.f32 %v1569, 0.0
        %v1643 = vmax.f32 %v1571, 0.0
        %v1644 = vmax.f32 %v1574, 0.0
        %v1645 = vmax.f32 %v1576, 0.0
        %v1646 = vmax.f32 %v1579, 0.0
        %v1647 = vmax.f32 %v1581, 0.0
        %v1648 = vmax.f32 %v1584, 0.0
        %v1649 = vmax.f32 %v1586, 0.0
        %v1650 = vmax.f32 %v1589, 0.0
        %v1651 = vmax.f32 %v1591, 0.0
        %v1652 = vmax.f32 %v1594, 0.0
        %v1653 = vmax.f32 %v1596, 0.0
        %v1654 = vmax.f32 %v1599, 0.0
        %v1655 = vmax.f32 %v1601, 0.0
        %v1656 = vmax.f32 %v1604, 0.0
        %v1657 = vmax.f32 %v1606, 0.0
        %v1658 = vmax.f32 %v1609, 0.0
        %v1659 = vmax.f32 %v1611, 0.0
        %v1660 = vmax.f32 %v1614, 0.0
        %v1661 = vmax.f32 %v1616, 0.0
        %v1662 = vmax.f32 %v1619, 0.0
        %v1663 = vmax.f32 %v1621, 0.0
        %v1664 = vmax.f32 %v1624, 0.0
        %v1665 = vmax.f32 %v1626, 0.0
        %v1666 = vmax.f32 %v1629, 0.0
        %v1667 = vmax.f32 %v1631, 0.0
        %v1668 = vmax.f32 %v1634, 0.0
        %v1669 = vmax.f32 %v1636, 0.0
        %v1670 = vrot.slane %v1638, 4
        %v1671 = vadd.f32 %v1638, %v1670
        %v1672 = vrot.slane %v1671, 2
        %v1673 = vadd.f32 %v1671, %v1672
        %v1674 = vrot.slane %v1673, 1
        %v1675 = vadd.f32 %v1673, %v1674
        %v1676 = vrot.slane %v1639, 4
        %v1677 = vadd.f32 %v1639, %v1676
        %v1678 = vrot.slane %v1677, 2
        %v1679 = vadd.f32 %v1677, %v1678
        %v1680 = vrot.slane %v1679, 1
        %v1681 = vadd.f32 %v1679, %v1680
        %v1682 = vrot.slane %v1640, 4
        %v1683 = vadd.f32 %v1640, %v1682
        %v1684 = vrot.slane %v1683, 2
        %v1685 = vadd.f32 %v1683, %v1684
        %v1686 = vrot.slane %v1685, 1
        %v1687 = vadd.f32 %v1685, %v1686
        %v1688 = vrot.slane %v1641, 4
        %v1689 = vadd.f32 %v1641, %v1688
        %v1690 = vrot.slane %v1689, 2
        %v1691 = vadd.f32 %v1689, %v1690
        %v1692 = vrot.slane %v1691, 1
        %v1693 = vadd.f32 %v1691, %v1692
        %v1694 = vrot.slane %v1642, 4
        %v1695 = vadd.f32 %v1642, %v1694
        %v1696 = vrot.slane %v1695, 2
        %v1697 = vadd.f32 %v1695, %v1696
        %v1698 = vrot.slane %v1697, 1
        %v1699 = vadd.f32 %v1697, %v1698
        %v1700 = vrot.slane %v1643, 4
        %v1701 = vadd.f32 %v1643, %v1700
        %v1702 = vrot.slane %v1701, 2
        %v1703 = vadd.f32 %v1701, %v1702
        %v1704 = vrot.slane %v1703, 1
        %v1705 = vadd.f32 %v1703, %v1704
        %v1706 = vrot.slane %v1644, 4
        %v1707 = vadd.f32 %v1644, %v1706
        %v1708 = vrot.slane %v1707, 2
        %v1709 = vadd.f32 %v1707, %v1708
        %v1710 = vrot.slane %v1709, 1
        %v1711 = vadd.f32 %v1709, %v1710
        %v1712 = vrot.slane %v1645, 4
        %v1713 = vadd.f32 %v1645, %v1712
        %v1714 = vrot.slane %v1713, 2
        %v1715 = vadd.f32 %v1713, %v1714
        %v1716 = vrot.slane %v1715, 1
        %v1717 = vadd.f32 %v1715, %v1716
        %v1718 = vrot.slane %v1646, 4
        %v1719 = vadd.f32 %v1646, %v1718
        %v1720 = vrot.slane %v1719, 2
        %v1721 = vadd.f32 %v1719, %v1720
        %v1722 = vrot.slane %v1721, 1
        %v1723 = vadd.f32 %v1721, %v1722
        %v1724 = vrot.slane %v1647, 4
        %v1725 = vadd.f32 %v1647, %v1724
        %v1726 = vrot.slane %v1725, 2
        %v1727 = vadd.f32 %v1725, %v1726
        %v1728 = vrot.slane %v1727, 1
        %v1729 = vadd.f32 %v1727, %v1728
        %v1730 = vrot.slane %v1648, 4
        %v1731 = vadd.f32 %v1648, %v1730
        %v1732 = vrot.slane %v1731, 2
        %v1733 = vadd.f32 %v1731, %v1732
        %v1734 = vrot.slane %v1733, 1
        %v1735 = vadd.f32 %v1733, %v1734
        %v1736 = vrot.slane %v1649, 4
        %v1737 = vadd.f32 %v1649, %v1736
        %v1738 = vrot.slane %v1737, 2
        %v1739 = vadd.f32 %v1737, %v1738
        %v1740 = vrot.slane %v1739, 1
        %v1741 = vadd.f32 %v1739, %v1740
        %v1742 = vrot.slane %v1650, 4
        %v1743 = vadd.f32 %v1650, %v1742
        %v1744 = vrot.slane %v1743, 2
        %v1745 = vadd.f32 %v1743, %v1744
        %v1746 = vrot.slane %v1745, 1
        %v1747 = vadd.f32 %v1745, %v1746
        %v1748 = vrot.slane %v1651, 4
        %v1749 = vadd.f32 %v1651, %v1748
        %v1750 = vrot.slane %v1749, 2
        %v1751 = vadd.f32 %v1749, %v1750
        %v1752 = vrot.slane %v1751, 1
        %v1753 = vadd.f32 %v1751, %v1752
        %v1754 = vrot.slane %v1652, 4
        %v1755 = vadd.f32 %v1652, %v1754
        %v1756 = vrot.slane %v1755, 2
        %v1757 = vadd.f32 %v1755, %v1756
        %v1758 = vrot.slane %v1757, 1
        %v1759 = vadd.f32 %v1757, %v1758
        %v1760 = vrot.slane %v1653, 4
        %v1761 = vadd.f32 %v1653, %v1760
        %v1762 = vrot.slane %v1761, 2
        %v1763 = vadd.f32 %v1761, %v1762
        %v1764 = vrot.slane %v1763, 1
        %v1765 = vadd.f32 %v1763, %v1764
        %v1766 = vrot.slane %v1654, 4
        %v1767 = vadd.f32 %v1654, %v1766
        %v1768 = vrot.slane %v1767, 2
        %v1769 = vadd.f32 %v1767, %v1768
        %v1770 = vrot.slane %v1769, 1
        %v1771 = vadd.f32 %v1769, %v1770
        %v1772 = vrot.slane %v1655, 4
        %v1773 = vadd.f32 %v1655, %v1772
        %v1774 = vrot.slane %v1773, 2
        %v1775 = vadd.f32 %v1773, %v1774
        %v1776 = vrot.slane %v1775, 1
        %v1777 = vadd.f32 %v1775, %v1776
        %v1778 = vrot.slane %v1656, 4
        %v1779 = vadd.f32 %v1656, %v1778
        %v1780 = vrot.slane %v1779, 2
        %v1781 = vadd.f32 %v1779, %v1780
        %v1782 = vrot.slane %v1781, 1
        %v1783 = vadd.f32 %v1781, %v1782
        %v1784 = vrot.slane %v1657, 4
        %v1785 = vadd.f32 %v1657, %v1784
        %v1786 = vrot.slane %v1785, 2
        %v1787 = vadd.f32 %v1785, %v1786
        %v1788 = vrot.slane %v1787, 1
        %v1789 = vadd.f32 %v1787, %v1788
        %v1790 = vrot.slane %v1658, 4
        %v1791 = vadd.f32 %v1658, %v1790
        %v1792 = vrot.slane %v1791, 2
        %v1793 = vadd.f32 %v1791, %v1792
        %v1794 = vrot.slane %v1793, 1
        %v1795 = vadd.f32 %v1793, %v1794
        %v1796 = vrot.slane %v1659, 4
        %v1797 = vadd.f32 %v1659, %v1796
        %v1798 = vrot.slane %v1797, 2
        %v1799 = vadd.f32 %v1797, %v1798
        %v1800 = vrot.slane %v1799, 1
        %v1801 = vadd.f32 %v1799, %v1800
        %v1802 = vrot.slane %v1660, 4
        %v1803 = vadd.f32 %v1660, %v1802
        %v1804 = vrot.slane %v1803, 2
        %v1805 = vadd.f32 %v1803, %v1804
        %v1806 = vrot.slane %v1805, 1
        %v1807 = vadd.f32 %v1805, %v1806
        %v1808 = vrot.slane %v1661, 4
        %v1809 = vadd.f32 %v1661, %v1808
        %v1810 = vrot.slane %v1809, 2
        %v1811 = vadd.f32 %v1809, %v1810
        %v1812 = vrot.slane %v1811, 1
        %v1813 = vadd.f32 %v1811, %v1812
        %v1814 = vrot.slane %v1662, 4
        %v1815 = vadd.f32 %v1662, %v1814
        %v1816 = vrot.slane %v1815, 2
        %v1817 = vadd.f32 %v1815, %v1816
        %v1818 = vrot.slane %v1817, 1
        %v1819 = vadd.f32 %v1817, %v1818
        %v1820 = vrot.slane %v1663, 4
        %v1821 = vadd.f32 %v1663, %v1820
        %v1822 = vrot.slane %v1821, 2
        %v1823 = vadd.f32 %v1821, %v1822
        %v1824 = vrot.slane %v1823, 1
        %v1825 = vadd.f32 %v1823, %v1824
        %v1826 = vrot.slane %v1664, 4
        %v1827 = vadd.f32 %v1664, %v1826
        %v1828 = vrot.slane %v1827, 2
        %v1829 = vadd.f32 %v1827, %v1828
        %v1830 = vrot.slane %v1829, 1
        %v1831 = vadd.f32 %v1829, %v1830
        %v1832 = vrot.slane %v1665, 4
        %v1833 = vadd.f32 %v1665, %v1832
        %v1834 = vrot.slane %v1833, 2
        %v1835 = vadd.f32 %v1833, %v1834
        %v1836 = vrot.slane %v1835, 1
        %v1837 = vadd.f32 %v1835, %v1836
        %v1838 = vrot.slane %v1666, 4
        %v1839 = vadd.f32 %v1666, %v1838
        %v1840 = vrot.slane %v1839, 2
        %v1841 = vadd.f32 %v1839, %v1840
        %v1842 = vrot.slane %v1841, 1
        %v1843 = vadd.f32 %v1841, %v1842
        %v1844 = vrot.slane %v1667, 4
        %v1845 = vadd.f32 %v1667, %v1844
        %v1846 = vrot.slane %v1845, 2
        %v1847 = vadd.f32 %v1845, %v1846
        %v1848 = vrot.slane %v1847, 1
        %v1849 = vadd.f32 %v1847, %v1848
        %v1850 = vrot.slane %v1668, 4
        %v1851 = vadd.f32 %v1668, %v1850
        %v1852 = vrot.slane %v1851, 2
        %v1853 = vadd.f32 %v1851, %v1852
        %v1854 = vrot.slane %v1853, 1
        %v1855 = vadd.f32 %v1853, %v1854
        %v1856 = vrot.slane %v1669, 4
        %v1857 = vadd.f32 %v1669, %v1856
        %v1858 = vrot.slane %v1857, 2
        %v1859 = vadd.f32 %v1857, %v1858
        %v1860 = vrot.slane %v1859, 1
        %v1861 = vadd.f32 %v1859, %v1860
        %v1862 = vrcp.pop 8.0
        %v1863 = vmul.f32 8.0, %v1862
        %v1864 = vsub.f32 1.0, %v1863
        %v1865 = vmul.f32 %v1862, %v1864
        %v1866 = vadd.f32 %v1862, %v1865
        %vm1867 = vweird.f32 %v1862
        %v1868 = vsel %vm1867, %v1862, %v1866
        %v1869 = vmul.f32 %v1675, %v1868
        %v1870 = vmul.f32 %v1681, %v1868
        %v1871 = vmul.f32 %v1687, %v1868
        %v1872 = vmul.f32 %v1693, %v1868
        %v1873 = vmul.f32 %v1699, %v1868
        %v1874 = vmul.f32 %v1705, %v1868
        %v1875 = vmul.f32 %v1711, %v1868
        %v1876 = vmul.f32 %v1717, %v1868
        %v1877 = vmul.f32 %v1723, %v1868
        %v1878 = vmul.f32 %v1729, %v1868
        %v1879 = vmul.f32 %v1735, %v1868
        %v1880 = vmul.f32 %v1741, %v1868
        %v1881 = vmul.f32 %v1747, %v1868
        %v1882 = vmul.f32 %v1753, %v1868
        %v1883 = vmul.f32 %v1759, %v1868
        %v1884 = vmul.f32 %v1765, %v1868
        %v1885 = vmul.f32 %v1771, %v1868
        %v1886 = vmul.f32 %v1777, %v1868
        %v1887 = vmul.f32 %v1783, %v1868
        %v1888 = vmul.f32 %v1789, %v1868
        %v1889 = vmul.f32 %v1795, %v1868
        %v1890 = vmul.f32 %v1801, %v1868
        %v1891 = vmul.f32 %v1807, %v1868
        %v1892 = vmul.f32 %v1813, %v1868
        %v1893 = vmul.f32 %v1819, %v1868
        %v1894 = vmul.f32 %v1825, %v1868
        %v1895 = vmul.f32 %v1831, %v1868
        %v1896 = vmul.f32 %v1837, %v1868
        %v1897 = vmul.f32 %v1843, %v1868
        %v1898 = vmul.f32 %v1849, %v1868
        %v1899 = vmul.f32 %v1855, %v1868
        %v1900 = vmul.f32 %v1861, %v1868
        %vm1933 = vcmask 1041409
        %v1934 = vsel %vm1933, %v1870, %v1869
        %vm1935 = vcmask 1042434
        %v1936 = vsel %vm1935, %v1871, %v1934
        %vm1937 = vcmask 1043459
        %v1938 = vsel %vm1937, %v1872, %v1936
        %vm1939 = vcmask 1044484
        %v1940 = vsel %vm1939, %v1873, %v1938
        %vm1941 = vcmask 1045509
        %v1942 = vsel %vm1941, %v1874, %v1940
        %vm1943 = vcmask 1046534
        %v1944 = vsel %vm1943, %v1875, %v1942
        %vm1945 = vcmask 1047559
        %v1946 = vsel %vm1945, %v1876, %v1944
        %v1947 = vsel %vm1933, %v1878, %v1877
        %v1948 = vsel %vm1935, %v1879, %v1947
        %v1949 = vsel %vm1937, %v1880, %v1948
        %v1950 = vsel %vm1939, %v1881, %v1949
        %v1951 = vsel %vm1941, %v1882, %v1950
        %v1952 = vsel %vm1943, %v1883, %v1951
        %v1953 = vsel %vm1945, %v1884, %v1952
        %v1954 = vsel %vm1933, %v1886, %v1885
        %v1955 = vsel %vm1935, %v1887, %v1954
        %v1956 = vsel %vm1937, %v1888, %v1955
        %v1957 = vsel %vm1939, %v1889, %v1956
        %v1958 = vsel %vm1941, %v1890, %v1957
        %v1959 = vsel %vm1943, %v1891, %v1958
        %v1960 = vsel %vm1945, %v1892, %v1959
        %v1961 = vsel %vm1933, %v1894, %v1893
        %v1962 = vsel %vm1935, %v1895, %v1961
        %v1963 = vsel %vm1937, %v1896, %v1962
        %v1964 = vsel %vm1939, %v1897, %v1963
        %v1965 = vsel %vm1941, %v1898, %v1964
        %v1966 = vsel %vm1943, %v1899, %v1965
        %v1967 = vsel %vm1945, %v1900, %v1966
        %1972 = vst [vmem:[%s164] sm:$0xff] %v1946
        %1973 = vst [vmem:[%s164 + $0x8] sm:$0xff] %v1953
        %1974 = vst [vmem:[%s164 + $0x10] sm:$0xff] %v1960
        %1975 = vst [vmem:[%s164 + $0x18] sm:$0xff] %v1967
        %s1976 = sand.u32 %s93, 1
        %s1977 = scalar_lea.sflag [#allocation3], %s1976
        %s1978 = sand.u32 %s93, 1
        %s1979 = smul.addr %s1978, 32
        %s1980 = scalar_lea.vmem [#allocation2], %s1979
        // Predicated region
        $region33: #{graph_encoder.1} parent=31 // pred_check
          %p1981 = pneg %p103
        $region34: #{graph_encoder.1} parent=31 // pred_check_branch
          %1983 = sbr.rel (%p1981) target = $region36
        $region35: #{graph_encoder.1} parent=31 // pred_region
          %s1984 = smul.u32 4, %s17
          %1986 = vsyncadd %s1977, 0
          %s1987 = smul.addr %s1984, 8
          %s1988 = scalar_lea.hbm %s3, %s1987
          %s1989 = sshll.u32 %s1980, 4
          %s1990 = int_to_ptr.vmem [resolvable:$true] %s1989
          %s1991 = sshll.u32 %s1988, 4
          %s1992 = int_to_ptr.hbm [resolvable:$true] %s1991
          %1997 = dma.vmem_to_hbm [thread:$0]  %s1990, 512, %s1992, %s1977, 128, 128, 8
        $region36: #{graph_encoder.1} parent=31 // pred_fallthru
          _
      $region32: #{graph_encoder.1} parent=5 // pred_fallthru
        _
      %p1998 = scmp.le.s32.totalorder 2, %s12
      // Predicated region
      $region37: #{graph_encoder.1} parent=5 // pred_check
        %p1999 = pneg %p1998
      $region38: #{graph_encoder.1} parent=5 // pred_check_branch
        %2001 = sbr.rel (%p1999) target = $region40
      $region39: #{graph_encoder.1} parent=5 // pred_region
        %s2002 = ssub.s32 %s12, 2
        // Predicated region
        $region41: #{graph_encoder.1} parent=39 // pred_check
          %p2003 = pneg %p109
        $region42: #{graph_encoder.1} parent=39 // pred_check_branch
          %2005 = sbr.rel (%p2003) target = $region44
        $region43: #{graph_encoder.1} parent=39 // pred_region
          %s2006 = sand.u32 %s94, 1
          %s2007 = scalar_lea.sflag [#allocation3], %s2006
          %s2008 = sand.u32 %s94, 1
          %s2009 = smul.addr %s2008, 32
          %s2010 = scalar_lea.vmem [#allocation2], %s2009
          %2012 = dma.done %s2007, 512
        $region44: #{graph_encoder.1} parent=39 // pred_fallthru
          _
      $region40: #{graph_encoder.1} parent=5 // pred_fallthru
        _
    $region6: #{graph_encoder.1} parent=1 // loop_footer
      %s16 = sadd.s32 1, %s12
    $region7: #{graph_encoder.1} parent=1 // loop_footer_branch
      %11 = sbr.rel target = $region3
    $region8: #{graph_encoder.1} parent=1 // loop_exit
      _
    %2013 = vsyncpa [#allocation3], 1
    %s2014 = scalar_lea.sflag [#allocation3], 1
    %2015 = vsyncpa %s2014, 1

</llo_original>
